<compile_context>
chip_gen: v5e
topology: v5e:2x2
jax: 0.10.0
libtpu: 0.0.40
codegen_flags: <defaults>
</compile_context>

<pallas_src>
import numpy as np

import jax
import jax.numpy as jnp
from jax import lax
from jax.experimental import pallas as pl
from jax.experimental.pallas import tpu as pltpu

K = 16         # conv129 kernel_size
PAD = 1        # conv129 padding (= dilation = 1)
LN_EPS = 1e-5  # nn.LayerNorm default eps


def adaptive_pool_matrix(l_in: int, l_out: int) -> np.ndarray:
    """(l_in, l_out) matrix P s.t.  AdaptiveAvgPool1d(x) == x @ P  (PyTorch bin rule)."""
    # NOTE: used here in the l_out > l_in (upsampling) regime; follows PyTorch's
    # documented start=floor(i*l_in/l_out), end=ceil((i+1)*l_in/l_out) rule.
    P = np.zeros((l_in, l_out), dtype=np.float32)
    for i in range(l_out):
        s = (i * l_in) // l_out
        e = -((-(i + 1) * l_in) // l_out)   # ceil((i+1)*l_in / l_out)
        P[s:e, i] = 1.0 / (e - s)
    return P


def _layer_norm_ref(x, gamma, beta):
    mean = jnp.mean(x, axis=-1, keepdims=True)
    var = jnp.mean((x - mean) ** 2, axis=-1, keepdims=True)
    return (x - mean) * lax.rsqrt(var + LN_EPS) * gamma + beta


def basic_block_kernel(x_ref, id_ref, m1_ref, m2_ref, a_ref,
                       g1_ref, b1_ref, g2_ref, b2_ref, o_ref):
    # x_ref  : (bt_pad, Cp*Lp)   flattened, zero-padded input tile (batch in sublanes)
    # id_ref : (bt_pad, Cp*F)    residual identity already in the output layout
    # m1_ref : (Cp*Lp, Cp*F)     conv1 (+) pool1 folded matrix
    # m2_ref : (Cp*F , Cp*F)     conv2 (+) pool2 folded matrix (conv padding absorbed)
    # a_ref  : (Cp*F , Cp*F)     block-diagonal 1/F averaging matrix (LayerNorm stats)
    # g*/b*  : (1, Cp*F)         LayerNorm affine params tiled per channel (0 on pad rows)
    # o_ref  : (bt_pad, Cp*F)    lane-dense output tile
    a = a_ref[...]

    def layer_norm(y, g, b):
        # Segmented (per-channel) mean/var over F lanes via a block-diag matmul:
        # keeps the reduction on the MXU, avoids any XLU lane reduction / relayout.
        mu = jnp.dot(y, a, preferred_element_type=jnp.float32)
        c = y - mu
        var = jnp.dot(c * c, a, preferred_element_type=jnp.float32)  # biased, like nn.LayerNorm
        return c * lax.rsqrt(var + LN_EPS) * g + b

    # ---- conv1 + AdaptiveAvgPool1d(F): one MXU matmul for the whole tile ----
    h = jnp.dot(x_ref[...], m1_ref[...], preferred_element_type=jnp.float32)
    h = jnp.maximum(layer_norm(h, g1_ref[...], b1_ref[...]), 0.0)

    # ---- conv2 + AdaptiveAvgPool1d(F): one MXU matmul ----
    y = jnp.dot(h, m2_ref[...], preferred_element_type=jnp.float32)
    y = layer_norm(y, g2_ref[...], b2_ref[...])

    # ---- residual + ReLU, single lane-dense store ----
    o_ref[...] = jnp.maximum(y + id_ref[...], 0.0)


def basic_block(x, w1, w2, g1, b1, g2, b2, len_feature, stride=1):
    """x: (N, C, L) float32; w1/w2: (C_out, C_in, K) PyTorch Conv1d layout (bias=False)."""
    if stride != 1:
        raise NotImplementedError("stride != 1 needs a downsample module")
    # TODO(synk): optional `downsample` module is None in this configuration; not implemented.
    N, C, L = x.shape
    C_out = w1.shape[0]
    F = int(len_feature)
    assert C == C_out and L == F, "residual add requires matching shapes"

    cp = ((C + 7) // 8) * 8              # pad channels to a full f32 sublane group
    Lp = L + 2 * PAD
    lc1 = Lp - K + 1                     # conv1 output length
    lc2 = F + 2 * PAD - K + 1            # conv2 output length
    cl = cp * Lp                         # flattened (channel, padded-length) lane width
    cf = cp * F                          # flattened (channel, feature)      lane width

    # ---------- host-side operand prep: fold conv+pool into one matrix per stage ----------
    w1p = np.zeros((cp, cp, K), np.float64); w1p[:C, :C] = np.asarray(w1, np.float64)
    w2p = np.zeros((cp, cp, K), np.float64); w2p[:C, :C] = np.asarray(w2, np.float64)
    P1 = adaptive_pool_matrix(lc1, F).astype(np.float64)
    P2 = adaptive_pool_matrix(lc2, F).astype(np.float64)

    # Stage 1:  y1[o,f] = sum_{i,m} M1[(o,f),(i,m)] * x_pad[i,m],  m = l + k
    M1 = np.zeros((cp, F, cp, Lp), np.float64)
    for k in range(K):
        M1[:, :, :, k:k + lc1] += np.einsum('oi,lf->ofil', w1p[:, :, k], P1)
    m1t = jnp.asarray(M1.reshape(cp * F, cp * Lp).T, jnp.float32)        # (Cp*Lp, Cp*F)

    # Stage 2 (conv padding absorbed):  y2[o,f] = sum_{i,m} M2[(o,f),(i,m)] * h[i,m],
    # with m = l + k - PAD (h_pad positions outside [0,F) contribute zero).
    M2 = np.zeros((cp, F, cp, F), np.float64)
    for k in range(K):
        lo_m = max(0, k - PAD)
        hi_m = min(F, lc2 + k - PAD)
        if lo_m >= hi_m:
            continue
        l_lo = lo_m - (k - PAD)
        l_hi = hi_m - (k - PAD)
        M2[:, :, :, lo_m:hi_m] += np.einsum('oi,lf->ofil', w2p[:, :, k], P2[l_lo:l_hi])
    m2t = jnp.asarray(M2.reshape(cp * F, cp * F).T, jnp.float32)         # (Cp*F, Cp*F)

    # Block-diagonal per-channel averaging matrix for LayerNorm statistics.
    ablk = jnp.asarray(np.kron(np.eye(cp), np.ones((F, F)) / F), jnp.float32)

    # gamma/beta tiled per channel; zeroed on padded channel rows so those rows stay
    # exactly 0 through both LayerNorms (padded rows are sliced off at the end anyway).
    chmask = (np.arange(cp) < C).astype(np.float64)[:, None]
    def _tile_ln(v):
        return jnp.asarray((chmask * np.asarray(v, np.float64)[None, :]).reshape(1, cf),
                           jnp.float32)
    g1t, b1t, g2t, b2t = (_tile_ln(v) for v in (g1, b1, g2, b2))

    # ---------- batch tiling ----------
    # Prefer >= 2 grid steps whenever N >= 2 (dual TensorCore on v7x, DMA/compute overlap
    # on all generations); cap the real rows per tile by a VMEM budget; pad the tile's
    # sublane dim to a full group of 8 so matmuls and stores are unmasked.
    per_row_bytes = 4 * (cl + 2 * cf) * 2                # in + identity + out, double-buffered
    vmem_budget = 8 << 20
    cap = max(1, vmem_budget // per_row_bytes)
    target = N if N < 2 else (N + 1) // 2
    target = min(target, cap)
    bt = max(d for d in range(1, N + 1) if N % d == 0 and d <= target)
    n_tiles = N // bt
    bt_pad = ((bt + 7) // 8) * 8

    xflat = jnp.pad(x, ((0, 0), (0, cp - C), (PAD, PAD))).reshape(n_tiles, bt, cl)
    xflat = jnp.pad(xflat, ((0, 0), (0, bt_pad - bt), (0, 0)))           # (T, bt_pad, Cp*Lp)
    ident = jnp.pad(x, ((0, 0), (0, cp - C), (0, 0))).reshape(n_tiles, bt, cf)
    ident = jnp.pad(ident, ((0, 0), (0, bt_pad - bt), (0, 0)))           # (T, bt_pad, Cp*F)

    out = pl.pallas_call(
        basic_block_kernel,
        out_shape=jax.ShapeDtypeStruct((n_tiles, bt_pad, cf), jnp.float32),
        grid_spec=pltpu.PrefetchScalarGridSpec(
            num_scalar_prefetch=0,
            grid=(n_tiles,),
            in_specs=[
                pl.BlockSpec((None, bt_pad, cl), lambda t: (t, 0, 0)),   # x tile
                pl.BlockSpec((None, bt_pad, cf), lambda t: (t, 0, 0)),   # identity tile
                pl.BlockSpec((cl, cf), lambda t: (0, 0)),                # M1^T
                pl.BlockSpec((cf, cf), lambda t: (0, 0)),                # M2^T
                pl.BlockSpec((cf, cf), lambda t: (0, 0)),                # Ablk
                pl.BlockSpec((1, cf), lambda t: (0, 0)),                 # gamma1
                pl.BlockSpec((1, cf), lambda t: (0, 0)),                 # beta1
                pl.BlockSpec((1, cf), lambda t: (0, 0)),                 # gamma2
                pl.BlockSpec((1, cf), lambda t: (0, 0)),                 # beta2
            ],
            out_specs=pl.BlockSpec((None, bt_pad, cf), lambda t: (t, 0, 0)),
        ),
        compiler_params=pltpu.CompilerParams(
            dimension_semantics=("parallel",),
            vmem_limit_bytes=32 * 1024 * 1024),
    )(xflat, ident, m1t, m2t, ablk, g1t, b1t, g2t, b2t)

    # (T, bt_pad, Cp*F) -> (N, C, F): drop padded batch rows and padded channel rows.
    return out[:, :bt, :].reshape(N, cp, F)[:, :C, :]


def basic_block_reference(x, w1, w2, g1, b1, g2, b2, len_feature):
    """Pure-JAX/XLA reference mirroring the PyTorch forward."""
    dn = lax.conv_dimension_numbers(x.shape, w1.shape, ('NCH', 'OIH', 'NCH'))
    out = lax.conv_general_dilated(x, w1, (1,), [(PAD, PAD)], dimension_numbers=dn,
                                   precision=lax.Precision.HIGHEST)
    out = jnp.einsum('ncl,lf->ncf', out,
                     jnp.asarray(adaptive_pool_matrix(out.shape[-1], len_feature)),
                     precision=lax.Precision.HIGHEST)
    out = jnp.maximum(_layer_norm_ref(out, g1, b1), 0.0)
    out = lax.conv_general_dilated(out, w2, (1,), [(PAD, PAD)], dimension_numbers=dn,
                                   precision=lax.Precision.HIGHEST)
    out = jnp.einsum('ncl,lf->ncf', out,
                     jnp.asarray(adaptive_pool_matrix(out.shape[-1], len_feature)),
                     precision=lax.Precision.HIGHEST)
    out = _layer_norm_ref(out, g2, b2)
    return jnp.maximum(out + x, 0.0)


if __name__ == "__main__":
    # inplanes = planes = 4, len_feature = L = 32, batch = 2, stride = 1, downsample = None
    N, C, L = 2, 4, 32
    len_feature = L

    key = jax.random.PRNGKey(0)
    kx, kw1, kw2, kg1, kb1, kg2, kb2 = jax.random.split(key, 7)
    x = jax.random.normal(kx, (N, C, L), jnp.float32)
    w1 = 0.1 * jax.random.normal(kw1, (C, C, K), jnp.float32)   # conv1 weight (O, I, K)
    w2 = 0.1 * jax.random.normal(kw2, (C, C, K), jnp.float32)   # conv2 weight
    g1 = 1.0 + 0.1 * jax.random.normal(kg1, (len_feature,), jnp.float32)
    b1 = 0.1 * jax.random.normal(kb1, (len_feature,), jnp.float32)
    g2 = 1.0 + 0.1 * jax.random.normal(kg2, (len_feature,), jnp.float32)
    b2 = 0.1 * jax.random.normal(kb2, (len_feature,), jnp.float32)

    out = jax.block_until_ready(basic_block(x, w1, w2, g1, b1, g2, b2, len_feature))
    ref = jax.block_until_ready(
        basic_block_reference(x, w1, w2, g1, b1, g2, b2, len_feature))
    np.testing.assert_allclose(np.asarray(out), np.asarray(ref), rtol=1e-2, atol=1e-2)

    print("KERNEL_OK")
</pallas_src>

<mosaic_0001>
module attributes {stable_mosaic.version = 11 : i64} {
  func.func @basic_block_kernel(%arg0: i32, %arg1: memref<1x8x272xf32, #tpu.memory_space<vmem>>, %arg2: memref<1x8x256xf32, #tpu.memory_space<vmem>>, %arg3: memref<272x256xf32, #tpu.memory_space<vmem>>, %arg4: memref<256x256xf32, #tpu.memory_space<vmem>>, %arg5: memref<256x256xf32, #tpu.memory_space<vmem>>, %arg6: memref<1x256xf32, #tpu.memory_space<vmem>>, %arg7: memref<1x256xf32, #tpu.memory_space<vmem>>, %arg8: memref<1x256xf32, #tpu.memory_space<vmem>>, %arg9: memref<1x256xf32, #tpu.memory_space<vmem>>, %arg10: memref<1x8x256xf32, #tpu.memory_space<vmem>>) attributes {dimension_semantics = [#tpu.dimension_semantics<parallel>], iteration_bounds = array<i64: 2>, scalar_prefetch = 0 : i64, scratch_operands = 0 : i64, tpu.core_type = #tpu.core_type<tc>, window_params = [{transform_indices = @transform_0, window_bounds = array<i64: 1, 8, 272>}, {transform_indices = @transform_1, window_bounds = array<i64: 1, 8, 256>}, {pipeline_mode = #tpu.pipeline_mode<synchronous>, transform_indices = @transform_2, window_bounds = array<i64: 272, 256>}, {pipeline_mode = #tpu.pipeline_mode<synchronous>, transform_indices = @transform_3, window_bounds = array<i64: 256, 256>}, {pipeline_mode = #tpu.pipeline_mode<synchronous>, transform_indices = @transform_4, window_bounds = array<i64: 256, 256>}, {pipeline_mode = #tpu.pipeline_mode<synchronous>, transform_indices = @transform_5, window_bounds = array<i64: 1, 256>}, {pipeline_mode = #tpu.pipeline_mode<synchronous>, transform_indices = @transform_6, window_bounds = array<i64: 1, 256>}, {pipeline_mode = #tpu.pipeline_mode<synchronous>, transform_indices = @transform_7, window_bounds = array<i64: 1, 256>}, {pipeline_mode = #tpu.pipeline_mode<synchronous>, transform_indices = @transform_8, window_bounds = array<i64: 1, 256>}, {transform_indices = @transform_9, window_bounds = array<i64: 1, 8, 256>}]} {
    %c0 = arith.constant 0 : index
    %c0_0 = arith.constant 0 : index
    %0 = vector.load %arg5[%c0, %c0_0] : memref<256x256xf32, #tpu.memory_space<vmem>>, vector<256x256xf32>
    %c0_1 = arith.constant 0 : index
    %c0_2 = arith.constant 0 : index
    %c0_3 = arith.constant 0 : index
    %1 = vector.load %arg1[%c0_1, %c0_2, %c0_3] : memref<1x8x272xf32, #tpu.memory_space<vmem>>, vector<1x8x272xf32>
    %2 = vector.shape_cast %1 : vector<1x8x272xf32> to vector<8x272xf32>
    %c0_4 = arith.constant 0 : index
    %c0_5 = arith.constant 0 : index
    %3 = vector.load %arg3[%c0_4, %c0_5] : memref<272x256xf32, #tpu.memory_space<vmem>>, vector<272x256xf32>
    %cst = arith.constant dense<0.000000e+00> : vector<8x256xf32>
    %4 = tpu.matmul %2, %3, %cst {dimension_numbers = #tpu.dot_dimension_numbers<[1], [0], [0], [1], [0, 0, 1, 1], [], []>} : vector<8x272xf32>, vector<272x256xf32>, vector<8x256xf32> -> vector<8x256xf32>
    %c0_6 = arith.constant 0 : index
    %c0_7 = arith.constant 0 : index
    %5 = vector.load %arg6[%c0_6, %c0_7] : memref<1x256xf32, #tpu.memory_space<vmem>>, vector<1x256xf32>
    %c0_8 = arith.constant 0 : index
    %c0_9 = arith.constant 0 : index
    %6 = vector.load %arg7[%c0_8, %c0_9] : memref<1x256xf32, #tpu.memory_space<vmem>>, vector<1x256xf32>
    %cst_10 = arith.constant dense<0.000000e+00> : vector<8x256xf32>
    %7 = tpu.matmul %4, %0, %cst_10 {dimension_numbers = #tpu.dot_dimension_numbers<[1], [0], [0], [1], [0, 0, 1, 1], [], []>} : vector<8x256xf32>, vector<256x256xf32>, vector<8x256xf32> -> vector<8x256xf32>
    %8 = arith.subf %4, %7 : vector<8x256xf32>
    %9 = arith.mulf %8, %8 : vector<8x256xf32>
    %cst_11 = arith.constant dense<0.000000e+00> : vector<8x256xf32>
    %10 = tpu.matmul %9, %0, %cst_11 {dimension_numbers = #tpu.dot_dimension_numbers<[1], [0], [0], [1], [0, 0, 1, 1], [], []>} : vector<8x256xf32>, vector<256x256xf32>, vector<8x256xf32> -> vector<8x256xf32>
    %cst_12 = arith.constant 9.99999974E-6 : f32
    %11 = vector.broadcast %cst_12 : f32 to vector<8x256xf32>
    %12 = arith.addf %10, %11 : vector<8x256xf32>
    %13 = math.rsqrt %12 : vector<8x256xf32>
    %14 = arith.mulf %8, %13 : vector<8x256xf32>
    %15 = vector.broadcast %5 : vector<1x256xf32> to vector<8x256xf32>
    %16 = arith.mulf %14, %15 : vector<8x256xf32>
    %17 = vector.broadcast %6 : vector<1x256xf32> to vector<8x256xf32>
    %18 = arith.addf %16, %17 : vector<8x256xf32>
    %cst_13 = arith.constant 0.000000e+00 : f32
    %19 = vector.broadcast %cst_13 : f32 to vector<8x256xf32>
    %20 = arith.maximumf %18, %19 : vector<8x256xf32>
    %c0_14 = arith.constant 0 : index
    %c0_15 = arith.constant 0 : index
    %21 = vector.load %arg4[%c0_14, %c0_15] : memref<256x256xf32, #tpu.memory_space<vmem>>, vector<256x256xf32>
    %cst_16 = arith.constant dense<0.000000e+00> : vector<8x256xf32>
    %22 = tpu.matmul %20, %21, %cst_16 {dimension_numbers = #tpu.dot_dimension_numbers<[1], [0], [0], [1], [0, 0, 1, 1], [], []>} : vector<8x256xf32>, vector<256x256xf32>, vector<8x256xf32> -> vector<8x256xf32>
    %c0_17 = arith.constant 0 : index
    %c0_18 = arith.constant 0 : index
    %23 = vector.load %arg8[%c0_17, %c0_18] : memref<1x256xf32, #tpu.memory_space<vmem>>, vector<1x256xf32>
    %c0_19 = arith.constant 0 : index
    %c0_20 = arith.constant 0 : index
    %24 = vector.load %arg9[%c0_19, %c0_20] : memref<1x256xf32, #tpu.memory_space<vmem>>, vector<1x256xf32>
    %cst_21 = arith.constant dense<0.000000e+00> : vector<8x256xf32>
    %25 = tpu.matmul %22, %0, %cst_21 {dimension_numbers = #tpu.dot_dimension_numbers<[1], [0], [0], [1], [0, 0, 1, 1], [], []>} : vector<8x256xf32>, vector<256x256xf32>, vector<8x256xf32> -> vector<8x256xf32>
    %26 = arith.subf %22, %25 : vector<8x256xf32>
    %27 = arith.mulf %26, %26 : vector<8x256xf32>
    %cst_22 = arith.constant dense<0.000000e+00> : vector<8x256xf32>
    %28 = tpu.matmul %27, %0, %cst_22 {dimension_numbers = #tpu.dot_dimension_numbers<[1], [0], [0], [1], [0, 0, 1, 1], [], []>} : vector<8x256xf32>, vector<256x256xf32>, vector<8x256xf32> -> vector<8x256xf32>
    %cst_23 = arith.constant 9.99999974E-6 : f32
    %29 = vector.broadcast %cst_23 : f32 to vector<8x256xf32>
    %30 = arith.addf %28, %29 : vector<8x256xf32>
    %31 = math.rsqrt %30 : vector<8x256xf32>
    %32 = arith.mulf %26, %31 : vector<8x256xf32>
    %33 = vector.broadcast %23 : vector<1x256xf32> to vector<8x256xf32>
    %34 = arith.mulf %32, %33 : vector<8x256xf32>
    %35 = vector.broadcast %24 : vector<1x256xf32> to vector<8x256xf32>
    %36 = arith.addf %34, %35 : vector<8x256xf32>
    %c0_24 = arith.constant 0 : index
    %c0_25 = arith.constant 0 : index
    %c0_26 = arith.constant 0 : index
    %37 = vector.load %arg2[%c0_24, %c0_25, %c0_26] : memref<1x8x256xf32, #tpu.memory_space<vmem>>, vector<1x8x256xf32>
    %38 = vector.shape_cast %37 : vector<1x8x256xf32> to vector<8x256xf32>
    %39 = arith.addf %36, %38 : vector<8x256xf32>
    %cst_27 = arith.constant 0.000000e+00 : f32
    %40 = vector.broadcast %cst_27 : f32 to vector<8x256xf32>
    %41 = arith.maximumf %39, %40 : vector<8x256xf32>
    %c0_28 = arith.constant 0 : index
    %c0_29 = arith.constant 0 : index
    %c0_30 = arith.constant 0 : index
    %42 = vector.load %arg10[%c0_28, %c0_29, %c0_30] : memref<1x8x256xf32, #tpu.memory_space<vmem>>, vector<1x8x256xf32>
    %43 = vector.shape_cast %42 : vector<1x8x256xf32> to vector<8x256xf32>
    %44 = vector.shape_cast %41 : vector<8x256xf32> to vector<1x8x256xf32>
    tpu.vector_store %arg10[%c0_28, %c0_29, %c0_30], %44 {strides = array<i32>} : memref<1x8x256xf32, #tpu.memory_space<vmem>>, vector<1x8x256xf32>,
    return
  }
  func.func @transform_0(%arg0: i32) -> (i32, i32, i32) {
    %c0_i32 = arith.constant 0 : i32
    %c0_i32_0 = arith.constant 0 : i32
    %c0_i32_1 = arith.constant 0 : i32
    return %arg0, %c0_i32, %c0_i32_0 : i32, i32, i32
  }
  func.func @transform_1(%arg0: i32) -> (i32, i32, i32) {
    %c0_i32 = arith.constant 0 : i32
    %c0_i32_0 = arith.constant 0 : i32
    %c0_i32_1 = arith.constant 0 : i32
    return %arg0, %c0_i32, %c0_i32_0 : i32, i32, i32
  }
  func.func @transform_2(%arg0: i32) -> (i32, i32) {
    %c0_i32 = arith.constant 0 : i32
    %c0_i32_0 = arith.constant 0 : i32
    %c0_i32_1 = arith.constant 0 : i32
    return %c0_i32, %c0_i32_0 : i32, i32
  }
  func.func @transform_3(%arg0: i32) -> (i32, i32) {
    %c0_i32 = arith.constant 0 : i32
    %c0_i32_0 = arith.constant 0 : i32
    %c0_i32_1 = arith.constant 0 : i32
    return %c0_i32, %c0_i32_0 : i32, i32
  }
  func.func @transform_4(%arg0: i32) -> (i32, i32) {
    %c0_i32 = arith.constant 0 : i32
    %c0_i32_0 = arith.constant 0 : i32
    %c0_i32_1 = arith.constant 0 : i32
    return %c0_i32, %c0_i32_0 : i32, i32
  }
  func.func @transform_5(%arg0: i32) -> (i32, i32) {
    %c0_i32 = arith.constant 0 : i32
    %c0_i32_0 = arith.constant 0 : i32
    %c0_i32_1 = arith.constant 0 : i32
    return %c0_i32, %c0_i32_0 : i32, i32
  }
  func.func @transform_6(%arg0: i32) -> (i32, i32) {
    %c0_i32 = arith.constant 0 : i32
    %c0_i32_0 = arith.constant 0 : i32
    %c0_i32_1 = arith.constant 0 : i32
    return %c0_i32, %c0_i32_0 : i32, i32
  }
  func.func @transform_7(%arg0: i32) -> (i32, i32) {
    %c0_i32 = arith.constant 0 : i32
    %c0_i32_0 = arith.constant 0 : i32
    %c0_i32_1 = arith.constant 0 : i32
    return %c0_i32, %c0_i32_0 : i32, i32
  }
  func.func @transform_8(%arg0: i32) -> (i32, i32) {
    %c0_i32 = arith.constant 0 : i32
    %c0_i32_0 = arith.constant 0 : i32
    %c0_i32_1 = arith.constant 0 : i32
    return %c0_i32, %c0_i32_0 : i32, i32
  }
  func.func @transform_9(%arg0: i32) -> (i32, i32, i32) {
    %c0_i32 = arith.constant 0 : i32
    %c0_i32_0 = arith.constant 0 : i32
    %c0_i32_1 = arith.constant 0 : i32
    return %arg0, %c0_i32, %c0_i32_0 : i32, i32, i32
  }
}

</mosaic_0001>

<llo_original>
// kernel: tpu_custom_call.1
$region0: #{tpu_custom_call.1}
  #allocation0 [shape = 'u32[]', space=smem, size = 0x4, offset = 0x4, fixed_abs, tag = 'smem constant byte address 0x4 - core index']
  #allocation1 [shape = 'u32[72,128]{1,0:T(1,128)}', space=vmem, size = 0x9000, scoped, tag = 'internal scratch']
  %s0 = inlined_call_operand.hbm [shape: f32[2,8,272], index: 0, kind: input, shape index: {}]
  %s1 = inlined_call_operand.hbm [shape: f32[2,8,256], index: 1, kind: input, shape index: {}]
  %s2 = inlined_call_operand.hbm [shape: f32[272,256], index: 2, kind: input, shape index: {}]
  %s3 = inlined_call_operand.hbm [shape: f32[256,256], index: 3, kind: input, shape index: {}]
  %s4 = inlined_call_operand.hbm [shape: f32[256,256], index: 4, kind: input, shape index: {}]
  %s5 = inlined_call_operand.vmem [shape: f32[1,256], index: 5, kind: input, shape index: {}]
  %s6 = inlined_call_operand.vmem [shape: f32[1,256], index: 6, kind: input, shape index: {}]
  %s7 = inlined_call_operand.vmem [shape: f32[1,256], index: 7, kind: input, shape index: {}]
  %s8 = inlined_call_operand.hbm [shape: f32[1,256], index: 8, kind: input, shape index: {}]
  %s9 = inlined_call_operand.hbm [shape: f32[2,8,256], index: 9, kind: output, shape index: {}]
  %s10 = sld [smem:[#allocation0]]
  $region93: #{tpu_custom_call.1} parent=0
    _
  %s12 = ssub.s32 1, %s10
  %s13 = scalar_select 0, %s12, %s10
  $region1: #{tpu_custom_call.1} parent=0
    #allocation2 [shape = 'u8[24576]{0}', space=vmem, size = 0x6000, scoped, tag = 'input window, operand 0']
    #allocation3 [shape = 's32[2]{0}', space=sflag, size = 0x8, scoped, tag = 'scoped memory for tpu_custom_call.1']
    #allocation4 [shape = 's32[2]{0}', space=sflag, size = 0x8, scoped, tag = 'scoped memory for tpu_custom_call.1']
    #allocation5 [shape = 'u8[16384]{0}', space=vmem, size = 0x4000, scoped, tag = 'input window, operand 1']
    #allocation6 [shape = 's32[2]{0}', space=sflag, size = 0x8, scoped, tag = 'scoped memory for tpu_custom_call.1']
    #allocation7 [shape = 'u8[278528]{0}', space=vmem, size = 0x44000, scoped, tag = 'input window, operand 2, single buffered']
    #allocation8 [shape = 'u8[262144]{0}', space=vmem, size = 0x40000, scoped, tag = 'input window, operand 3, single buffered']
    #allocation9 [shape = 's32[1]{0}', space=sflag, size = 0x4, scoped, tag = 'scoped memory for tpu_custom_call.1']
    #allocation10 [shape = 'u8[262144]{0}', space=vmem, size = 0x40000, scoped, tag = 'input window, operand 4, single buffered']
    #allocation11 [shape = 'u8[1024]{0}', space=vmem, size = 0x400, scoped, tag = 'input window, operand 8, single buffered']
    #allocation12 [shape = 's32[1]{0}', space=sflag, size = 0x4, scoped, tag = 'scoped memory for tpu_custom_call.1']
    #allocation13 [shape = 'u8[16384]{0}', space=vmem, size = 0x4000, scoped, tag = 'output window, operand 0']
    %14 = vsyncpa [#allocation3], 0
    %s15 = scalar_lea.sflag [#allocation3], 1
    %16 = vsyncpa %s15, 0
    %17 = vsyncpa [#allocation6], 0
    %s18 = scalar_lea.sflag [#allocation6], 1
    %19 = vsyncpa %s18, 0
    %20 = vsyncpa [#allocation9], 0
    %21 = vsyncpa [#allocation12], 0
    %22 = vsyncpa [#allocation4], 0
    %s23 = scalar_lea.sflag [#allocation4], 1
    %24 = vsyncpa %s23, 0
    loop: start=0, step=1, limit=4
    $region2: #{tpu_custom_call.1} parent=1 // loop_pre_header
      _
    $region3: #{tpu_custom_call.1} parent=1 // loop_header
      %s26 = sphi 0, %s30
      %p27 = scmp.ge.s32.totalorder %s26, 4
      %s36 = sphi 0, %s38
      %s39 = sphi 0, %s36
      %s40 = sphi 0, %s39
      %s56 = sphi 0, %s40
      %s62 = sphi 0, %s64
      %s65 = sphi 0, %s62
      %s66 = sphi 0, %s65
      %s82 = sphi 0, %s66
      %s86 = sphi 0, %s86
      %s88 = sphi 0, %s86
      %s89 = sphi 0, %s88
      %s103 = sphi 0, %s89
      %s107 = sphi 0, %s107
      %s109 = sphi 0, %s107
      %s110 = sphi 0, %s109
      %s124 = sphi 0, %s110
      %s128 = sphi 0, %s128
      %s130 = sphi 0, %s128
      %s131 = sphi 0, %s130
      %s145 = sphi 0, %s131
      %s149 = sphi 0, %s149
      %s151 = sphi 0, %s149
      %s152 = sphi 0, %s151
      %s166 = sphi 0, %s152
      %s170 = sphi 0, %s170
      %s172 = sphi 0, %s170
      %s173 = sphi 0, %s172
      %s187 = sphi 0, %s173
      %s191 = sphi 0, %s191
      %s193 = sphi 0, %s191
      %s194 = sphi 0, %s193
      %s208 = sphi 0, %s194
      %s212 = sphi 0, %s212
      %s214 = sphi 0, %s212
      %s215 = sphi 0, %s214
      %s229 = sphi 0, %s215
      %s235 = sphi 0, %s237
      %s238 = sphi 0, %s235
      %s239 = sphi 0, %s238
      %s255 = sphi 0, %s239
    $region4: #{tpu_custom_call.1} parent=1 // loop_header_branch
      %29 = sbr.rel (%p27) target = $region8
    $region5: #{tpu_custom_call.1} parent=1 // loop_body
      %s31 = ssub.s32 %s26, 1
      %s32 = ssub.s32 %s26, 2
      %s33 = sadd.s32 %s26, 1
      %s34 = ssub.s32 %s26, %s33
      %p35 = scmp.eq.s32.totalorder %s34, 0
      %s37 = sadd.s32 %s36, 1
      %s38 = scalar_select %p35, %s36, %s37
      %p41 = pneg %p35
      %p42 = scmp.eq.s32.totalorder %s26, 1
      %p43 = por %p41, %p42
      %p44 = scmp.ne.s32.totalorder %s36, %s39
      %p45 = scmp.eq.s32.totalorder %s26, 0
      %p46 = por %p44, %p45
      %p47 = scmp.ne.s32.totalorder %s36, %s39
      %p48 = scmp.eq.s32.totalorder %s31, 1
      %p49 = por %p47, %p48
      %p50 = scmp.ne.s32.totalorder %s39, %s40
      %p51 = scmp.eq.s32.totalorder %s31, 0
      %p52 = por %p50, %p51
      %p53 = scmp.ne.s32.totalorder %s39, %s40
      %p54 = scmp.eq.s32.totalorder %s32, 1
      %p55 = por %p53, %p54
      %p57 = scmp.ne.s32.totalorder %s40, %s56
      %p58 = scmp.eq.s32.totalorder %s32, 0
      %p59 = por %p57, %p58
      %s60 = ssub.s32 %s26, %s33
      %p61 = scmp.eq.s32.totalorder %s60, 0
      %s63 = sadd.s32 %s62, 1
      %s64 = scalar_select %p61, %s62, %s63
      %p67 = pneg %p61
      %p68 = scmp.eq.s32.totalorder %s26, 1
      %p69 = por %p67, %p68
      %p70 = scmp.ne.s32.totalorder %s62, %s65
      %p71 = scmp.eq.s32.totalorder %s26, 0
      %p72 = por %p70, %p71
      %p73 = scmp.ne.s32.totalorder %s62, %s65
      %p74 = scmp.eq.s32.totalorder %s31, 1
      %p75 = por %p73, %p74
      %p76 = scmp.ne.s32.totalorder %s65, %s66
      %p77 = scmp.eq.s32.totalorder %s31, 0
      %p78 = por %p76, %p77
      %p79 = scmp.ne.s32.totalorder %s65, %s66
      %p80 = scmp.eq.s32.totalorder %s32, 1
      %p81 = por %p79, %p80
      %p83 = scmp.ne.s32.totalorder %s66, %s82
      %p84 = scmp.eq.s32.totalorder %s32, 0
      %p85 = por %p83, %p84
      %s87 = sadd.s32 %s86, 1
      %p90 = scmp.eq.s32.totalorder %s26, 1
      %p91 = scmp.ne.s32.totalorder %s86, %s88
      %p92 = scmp.eq.s32.totalorder %s26, 0
      %p93 = por %p91, %p92
      %p94 = scmp.ne.s32.totalorder %s86, %s88
      %p95 = scmp.eq.s32.totalorder %s31, 1
      %p96 = por %p94, %p95
      %p97 = scmp.ne.s32.totalorder %s88, %s89
      %p98 = scmp.eq.s32.totalorder %s31, 0
      %p99 = por %p97, %p98
      %p100 = scmp.ne.s32.totalorder %s88, %s89
      %p101 = scmp.eq.s32.totalorder %s32, 1
      %p102 = por %p100, %p101
      %p104 = scmp.ne.s32.totalorder %s89, %s103
      %p105 = scmp.eq.s32.totalorder %s32, 0
      %p106 = por %p104, %p105
      %s108 = sadd.s32 %s107, 1
      %p111 = scmp.eq.s32.totalorder %s26, 1
      %p112 = scmp.ne.s32.totalorder %s107, %s109
      %p113 = scmp.eq.s32.totalorder %s26, 0
      %p114 = por %p112, %p113
      %p115 = scmp.ne.s32.totalorder %s107, %s109
      %p116 = scmp.eq.s32.totalorder %s31, 1
      %p117 = por %p115, %p116
      %p118 = scmp.ne.s32.totalorder %s109, %s110
      %p119 = scmp.eq.s32.totalorder %s31, 0
      %p120 = por %p118, %p119
      %p121 = scmp.ne.s32.totalorder %s109, %s110
      %p122 = scmp.eq.s32.totalorder %s32, 1
      %p123 = por %p121, %p122
      %p125 = scmp.ne.s32.totalorder %s110, %s124
      %p126 = scmp.eq.s32.totalorder %s32, 0
      %p127 = por %p125, %p126
      %s129 = sadd.s32 %s128, 1
      %p132 = scmp.eq.s32.totalorder %s26, 1
      %p133 = scmp.ne.s32.totalorder %s128, %s130
      %p134 = scmp.eq.s32.totalorder %s26, 0
      %p135 = por %p133, %p134
      %p136 = scmp.ne.s32.totalorder %s128, %s130
      %p137 = scmp.eq.s32.totalorder %s31, 1
      %p138 = por %p136, %p137
      %p139 = scmp.ne.s32.totalorder %s130, %s131
      %p140 = scmp.eq.s32.totalorder %s31, 0
      %p141 = por %p139, %p140
      %p142 = scmp.ne.s32.totalorder %s130, %s131
      %p143 = scmp.eq.s32.totalorder %s32, 1
      %p144 = por %p142, %p143
      %p146 = scmp.ne.s32.totalorder %s131, %s145
      %p147 = scmp.eq.s32.totalorder %s32, 0
      %p148 = por %p146, %p147
      %s150 = sadd.s32 %s149, 1
      %p153 = scmp.eq.s32.totalorder %s26, 1
      %p154 = scmp.ne.s32.totalorder %s149, %s151
      %p155 = scmp.eq.s32.totalorder %s26, 0
      %p156 = por %p154, %p155
      %p157 = scmp.ne.s32.totalorder %s149, %s151
      %p158 = scmp.eq.s32.totalorder %s31, 1
      %p159 = por %p157, %p158
      %p160 = scmp.ne.s32.totalorder %s151, %s152
      %p161 = scmp.eq.s32.totalorder %s31, 0
      %p162 = por %p160, %p161
      %p163 = scmp.ne.s32.totalorder %s151, %s152
      %p164 = scmp.eq.s32.totalorder %s32, 1
      %p165 = por %p163, %p164
      %p167 = scmp.ne.s32.totalorder %s152, %s166
      %p168 = scmp.eq.s32.totalorder %s32, 0
      %p169 = por %p167, %p168
      %s171 = sadd.s32 %s170, 1
      %p174 = scmp.eq.s32.totalorder %s26, 1
      %p175 = scmp.ne.s32.totalorder %s170, %s172
      %p176 = scmp.eq.s32.totalorder %s26, 0
      %p177 = por %p175, %p176
      %p178 = scmp.ne.s32.totalorder %s170, %s172
      %p179 = scmp.eq.s32.totalorder %s31, 1
      %p180 = por %p178, %p179
      %p181 = scmp.ne.s32.totalorder %s172, %s173
      %p182 = scmp.eq.s32.totalorder %s31, 0
      %p183 = por %p181, %p182
      %p184 = scmp.ne.s32.totalorder %s172, %s173
      %p185 = scmp.eq.s32.totalorder %s32, 1
      %p186 = por %p184, %p185
      %p188 = scmp.ne.s32.totalorder %s173, %s187
      %p189 = scmp.eq.s32.totalorder %s32, 0
      %p190 = por %p188, %p189
      %s192 = sadd.s32 %s191, 1
      %p195 = scmp.eq.s32.totalorder %s26, 1
      %p196 = scmp.ne.s32.totalorder %s191, %s193
      %p197 = scmp.eq.s32.totalorder %s26, 0
      %p198 = por %p196, %p197
      %p199 = scmp.ne.s32.totalorder %s191, %s193
      %p200 = scmp.eq.s32.totalorder %s31, 1
      %p201 = por %p199, %p200
      %p202 = scmp.ne.s32.totalorder %s193, %s194
      %p203 = scmp.eq.s32.totalorder %s31, 0
      %p204 = por %p202, %p203
      %p205 = scmp.ne.s32.totalorder %s193, %s194
      %p206 = scmp.eq.s32.totalorder %s32, 1
      %p207 = por %p205, %p206
      %p209 = scmp.ne.s32.totalorder %s194, %s208
      %p210 = scmp.eq.s32.totalorder %s32, 0
      %p211 = por %p209, %p210
      %s213 = sadd.s32 %s212, 1
      %p216 = scmp.eq.s32.totalorder %s26, 1
      %p217 = scmp.ne.s32.totalorder %s212, %s214
      %p218 = scmp.eq.s32.totalorder %s26, 0
      %p219 = por %p217, %p218
      %p220 = scmp.ne.s32.totalorder %s212, %s214
      %p221 = scmp.eq.s32.totalorder %s31, 1
      %p222 = por %p220, %p221
      %p223 = scmp.ne.s32.totalorder %s214, %s215
      %p224 = scmp.eq.s32.totalorder %s31, 0
      %p225 = por %p223, %p224
      %p226 = scmp.ne.s32.totalorder %s214, %s215
      %p227 = scmp.eq.s32.totalorder %s32, 1
      %p228 = por %p226, %p227
      %p230 = scmp.ne.s32.totalorder %s215, %s229
      %p231 = scmp.eq.s32.totalorder %s32, 0
      %p232 = por %p230, %p231
      %s233 = ssub.s32 %s26, %s33
      %p234 = scmp.eq.s32.totalorder %s233, 0
      %s236 = sadd.s32 %s235, 1
      %s237 = scalar_select %p234, %s235, %s236
      %p240 = pneg %p234
      %p241 = scmp.eq.s32.totalorder %s26, 1
      %p242 = por %p240, %p241
      %p243 = scmp.ne.s32.totalorder %s235, %s238
      %p244 = scmp.eq.s32.totalorder %s26, 0
      %p245 = por %p243, %p244
      %p246 = scmp.ne.s32.totalorder %s235, %s238
      %p247 = scmp.eq.s32.totalorder %s31, 1
      %p248 = por %p246, %p247
      %p249 = scmp.ne.s32.totalorder %s238, %s239
      %p250 = scmp.eq.s32.totalorder %s31, 0
      %p251 = por %p249, %p250
      %p252 = scmp.ne.s32.totalorder %s238, %s239
      %p253 = scmp.eq.s32.totalorder %s32, 1
      %p254 = por %p252, %p253
      %p256 = scmp.ne.s32.totalorder %s239, %s255
      %p257 = scmp.eq.s32.totalorder %s32, 0
      %p258 = por %p256, %p257
      %p259 = scmp.le.s32.totalorder 1, %s26
      %p260 = scmp.lt.s32.totalorder %s26, 3
      %p261 = pnand %p259, %p260
      %p262 = pneg %p261
      // Predicated region
      $region9: #{tpu_custom_call.1} parent=5 // pred_check
        _
      $region10: #{tpu_custom_call.1} parent=5 // pred_check_branch
        %264 = sbr.rel (%p261) target = $region12
      $region11: #{tpu_custom_call.1} parent=5 // pred_region
        %s265 = ssub.s32 %s26, 1
        // Predicated region
        $region13: #{tpu_custom_call.1} parent=11 // pred_check
          %p266 = pneg %p99
        $region14: #{tpu_custom_call.1} parent=11 // pred_check_branch
          %268 = sbr.rel (%p266) target = $region16
        $region15: #{tpu_custom_call.1} parent=11 // pred_region
          %270 = vsyncadd [#allocation6], 0
          %s271 = sshll.u32 %s2, 4
          %s272 = int_to_ptr.hbm [resolvable:$true] %s271
          %s273 = sshll.u32 [#allocation7], 4
          %s274 = int_to_ptr.vmem [resolvable:$true] %s273
          %279 = dma.hbm_to_vmem [thread:$0]  %s272, 8704, %s274, [#allocation6], 256, 256, 16
        $region16: #{tpu_custom_call.1} parent=11 // pred_fallthru
          _
        // Predicated region
        $region17: #{tpu_custom_call.1} parent=11 // pred_check
          %p280 = pneg %p120
        $region18: #{tpu_custom_call.1} parent=11 // pred_check_branch
          %282 = sbr.rel (%p280) target = $region20
        $region19: #{tpu_custom_call.1} parent=11 // pred_region
          %284 = vsyncadd [#allocation9], 0
          %s285 = sshll.u32 %s3, 4
          %s286 = int_to_ptr.hbm [resolvable:$true] %s285
          %s287 = sshll.u32 [#allocation8], 4
          %s288 = int_to_ptr.vmem [resolvable:$true] %s287
          %293 = dma.hbm_to_vmem [thread:$0]  %s286, 8192, %s288, [#allocation9], 256, 256, 16
        $region20: #{tpu_custom_call.1} parent=11 // pred_fallthru
          _
        // Predicated region
        $region21: #{tpu_custom_call.1} parent=11 // pred_check
          %p294 = pneg %p141
        $region22: #{tpu_custom_call.1} parent=11 // pred_check_branch
          %296 = sbr.rel (%p294) target = $region24
        $region23: #{tpu_custom_call.1} parent=11 // pred_region
          %298 = vsyncadd [#allocation9], 0
          %s299 = sshll.u32 %s4, 4
          %s300 = int_to_ptr.hbm [resolvable:$true] %s299
          %s301 = sshll.u32 [#allocation10], 4
          %s302 = int_to_ptr.vmem [resolvable:$true] %s301
          %307 = dma.hbm_to_vmem [thread:$0]  %s300, 8192, %s302, [#allocation9], 256, 256, 16
        $region24: #{tpu_custom_call.1} parent=11 // pred_fallthru
          _
        // Predicated region
        $region25: #{tpu_custom_call.1} parent=11 // pred_check
          %p308 = pneg %p162
        $region26: #{tpu_custom_call.1} parent=11 // pred_check_branch
          %310 = sbr.rel (%p308) target = $region28
        $region27: #{tpu_custom_call.1} parent=11 // pred_region
          _
        $region28: #{tpu_custom_call.1} parent=11 // pred_fallthru
          _
        // Predicated region
        $region29: #{tpu_custom_call.1} parent=11 // pred_check
          %p311 = pneg %p183
        $region30: #{tpu_custom_call.1} parent=11 // pred_check_branch
          %313 = sbr.rel (%p311) target = $region32
        $region31: #{tpu_custom_call.1} parent=11 // pred_region
          _
        $region32: #{tpu_custom_call.1} parent=11 // pred_fallthru
          _
        // Predicated region
        $region33: #{tpu_custom_call.1} parent=11 // pred_check
          %p314 = pneg %p204
        $region34: #{tpu_custom_call.1} parent=11 // pred_check_branch
          %316 = sbr.rel (%p314) target = $region36
        $region35: #{tpu_custom_call.1} parent=11 // pred_region
          _
        $region36: #{tpu_custom_call.1} parent=11 // pred_fallthru
          _
        // Predicated region
        $region37: #{tpu_custom_call.1} parent=11 // pred_check
          %p317 = pneg %p225
        $region38: #{tpu_custom_call.1} parent=11 // pred_check_branch
          %319 = sbr.rel (%p317) target = $region40
        $region39: #{tpu_custom_call.1} parent=11 // pred_region
          %321 = vsyncadd [#allocation12], 0
          %s323 = sshll.u32 %s8, 4
          %s324 = int_to_ptr.hbm [resolvable:$true] %s323
          %s325 = sshll.u32 [#allocation11], 4
          %s326 = int_to_ptr.vmem [resolvable:$true] %s325
          %328 = dma.hbm_to_vmem [thread:$0]  %s324, 32, %s326, [#allocation12]
        $region40: #{tpu_custom_call.1} parent=11 // pred_fallthru
          _
      $region12: #{tpu_custom_call.1} parent=5 // pred_fallthru
        _
      %p329 = scmp.lt.s32.totalorder %s26, 2
      // Predicated region
      $region41: #{tpu_custom_call.1} parent=5 // pred_check
        %p330 = pneg %p329
      $region42: #{tpu_custom_call.1} parent=5 // pred_check_branch
        %332 = sbr.rel (%p330) target = $region44
      $region43: #{tpu_custom_call.1} parent=5 // pred_region
        // Predicated region
        $region45: #{tpu_custom_call.1} parent=43 // pred_check
          %p333 = pneg %p46
        $region46: #{tpu_custom_call.1} parent=43 // pred_check_branch
          %335 = sbr.rel (%p333) target = $region48
        $region47: #{tpu_custom_call.1} parent=43 // pred_region
          %s336 = sand.u32 %s36, 1
          %s337 = scalar_lea.sflag [#allocation3], %s336
          %s338 = sand.u32 %s36, 1
          %s339 = smul.addr %s338, 24
          %s340 = scalar_lea.vmem [#allocation2], %s339
          %342 = vsyncadd %s337, 0
          %s343 = smul.addr %s26, 3
          %s344 = smul.addr %s343, 8
          %s345 = scalar_lea.hbm %s0, %s344
          %s347 = sshll.u32 %s345, 4
          %s348 = int_to_ptr.hbm [resolvable:$true] %s347
          %s349 = sshll.u32 %s340, 4
          %s350 = int_to_ptr.vmem [resolvable:$true] %s349
          %352 = dma.hbm_to_vmem [thread:$0]  %s348, 384, %s350, %s337
        $region48: #{tpu_custom_call.1} parent=43 // pred_fallthru
          _
        // Predicated region
        $region49: #{tpu_custom_call.1} parent=43 // pred_check
          %p353 = pneg %p72
        $region50: #{tpu_custom_call.1} parent=43 // pred_check_branch
          %355 = sbr.rel (%p353) target = $region52
        $region51: #{tpu_custom_call.1} parent=43 // pred_region
          %s356 = sand.u32 %s26, 1
          %s357 = scalar_lea.sflag [#allocation6], %s356
          %s358 = sand.u32 %s62, 1
          %s359 = smul.addr %s358, 16
          %s360 = scalar_lea.vmem [#allocation5], %s359
          %362 = vsyncadd %s357, 0
          %s363 = smul.addr %s26, 2
          %s364 = smul.addr %s363, 8
          %s365 = scalar_lea.hbm %s1, %s364
          %s367 = sshll.u32 %s365, 4
          %s368 = int_to_ptr.hbm [resolvable:$true] %s367
          %s369 = sshll.u32 %s360, 4
          %s370 = int_to_ptr.vmem [resolvable:$true] %s369
          %372 = dma.hbm_to_vmem [thread:$0]  %s368, 256, %s370, %s357
        $region52: #{tpu_custom_call.1} parent=43 // pred_fallthru
          _
      $region44: #{tpu_custom_call.1} parent=5 // pred_fallthru
        _
      %p373 = scmp.le.s32.totalorder 1, %s26
      %p374 = scmp.lt.s32.totalorder %s26, 3
      %p375 = pnand %p373, %p374
      %p376 = pneg %p375
      // Predicated region
      $region53: #{tpu_custom_call.1} parent=5 // pred_check
        _
      $region54: #{tpu_custom_call.1} parent=5 // pred_check_branch
        %378 = sbr.rel (%p375) target = $region56
      $region55: #{tpu_custom_call.1} parent=5 // pred_region
        %s379 = ssub.s32 %s26, 1
        %s380 = sand.u32 %s39, 1
        %s381 = scalar_lea.sflag [#allocation3], %s380
        %s382 = sand.u32 %s39, 1
        %s383 = smul.addr %s382, 24
        %s384 = scalar_lea.vmem [#allocation2], %s383
        // Predicated region
        $region57: #{tpu_custom_call.1} parent=55 // pred_check
          %p385 = pneg %p52
        $region58: #{tpu_custom_call.1} parent=55 // pred_check_branch
          %387 = sbr.rel (%p385) target = $region60
        $region59: #{tpu_custom_call.1} parent=55 // pred_region
          %389 = dma.done %s381, 384
        $region60: #{tpu_custom_call.1} parent=55 // pred_fallthru
          _
        %s390 = sand.u32 %s31, 1
        %s391 = scalar_lea.sflag [#allocation6], %s390
        %s392 = sand.u32 %s65, 1
        %s393 = smul.addr %s392, 16
        %s394 = scalar_lea.vmem [#allocation5], %s393
        // Predicated region
        $region61: #{tpu_custom_call.1} parent=55 // pred_check
          %p395 = pneg %p78
        $region62: #{tpu_custom_call.1} parent=55 // pred_check_branch
          %397 = sbr.rel (%p395) target = $region64
        $region63: #{tpu_custom_call.1} parent=55 // pred_region
          %399 = dma.done %s391, 256
        $region64: #{tpu_custom_call.1} parent=55 // pred_fallthru
          _
        // Predicated region
        $region65: #{tpu_custom_call.1} parent=55 // pred_check
          %p400 = pneg %p99
        $region66: #{tpu_custom_call.1} parent=55 // pred_check_branch
          %402 = sbr.rel (%p400) target = $region68
        $region67: #{tpu_custom_call.1} parent=55 // pred_region
          %404 = dma.done [#allocation6], 8704
        $region68: #{tpu_custom_call.1} parent=55 // pred_fallthru
          _
        // Predicated region
        $region69: #{tpu_custom_call.1} parent=55 // pred_check
          %p405 = pneg %p120
        $region70: #{tpu_custom_call.1} parent=55 // pred_check_branch
          %407 = sbr.rel (%p405) target = $region72
        $region71: #{tpu_custom_call.1} parent=55 // pred_region
          %409 = dma.done [#allocation9], 8192
        $region72: #{tpu_custom_call.1} parent=55 // pred_fallthru
          _
        // Predicated region
        $region73: #{tpu_custom_call.1} parent=55 // pred_check
          %p410 = pneg %p141
        $region74: #{tpu_custom_call.1} parent=55 // pred_check_branch
          %412 = sbr.rel (%p410) target = $region76
        $region75: #{tpu_custom_call.1} parent=55 // pred_region
          %414 = dma.done [#allocation9], 8192
        $region76: #{tpu_custom_call.1} parent=55 // pred_fallthru
          _
        // Predicated region
        $region77: #{tpu_custom_call.1} parent=55 // pred_check
          %p415 = pneg %p225
        $region78: #{tpu_custom_call.1} parent=55 // pred_check_branch
          %417 = sbr.rel (%p415) target = $region80
        $region79: #{tpu_custom_call.1} parent=55 // pred_region
          %419 = dma.done [#allocation12], 32
        $region80: #{tpu_custom_call.1} parent=55 // pred_fallthru
          _
        %s420 = sand.u32 %s39, 1
        %s421 = scalar_lea.sflag [#allocation3], %s420
        %s422 = sand.u32 %s39, 1
        %s423 = smul.addr %s422, 24
        %s424 = scalar_lea.vmem [#allocation2], %s423
        %p425 = pneg %p52
        %p426 = pneg %p49
        %s427 = sand.u32 %s31, 1
        %s428 = scalar_lea.sflag [#allocation6], %s427
        %s429 = sand.u32 %s65, 1
        %s430 = smul.addr %s429, 16
        %s431 = scalar_lea.vmem [#allocation5], %s430
        %p432 = pneg %p78
        %p433 = pneg %p75
        %p434 = pneg %p99
        %p435 = pneg %p96
        %p436 = pneg %p120
        %p437 = pneg %p117
        %p438 = pneg %p141
        %p439 = pneg %p138
        %p440 = pneg %p162
        %p441 = pneg %p159
        %p442 = pneg %p183
        %p443 = pneg %p180
        %p444 = pneg %p204
        %p445 = pneg %p201
        %p446 = pneg %p225
        %p447 = pneg %p222
        %p448 = pneg %p251
        %p449 = pneg %p248
        %s450 = sand.u32 %s238, 1
        %s451 = scalar_lea.sflag [#allocation4], %s450
        %s452 = sand.u32 %s238, 1
        %s453 = smul.addr %s452, 16
        %s454 = scalar_lea.vmem [#allocation13], %s453
        %v455 = vld [vmem:[#allocation10] sm:$0xff]
        %v456 = vld [vmem:[#allocation10 + $0x8] sm:$0xff]
        %v457 = vld [vmem:[#allocation10 + $0x10] sm:$0xff]
        %v458 = vld [vmem:[#allocation10 + $0x18] sm:$0xff]
        %v459 = vld [vmem:[#allocation10 + $0x20] sm:$0xff]
        %v460 = vld [vmem:[#allocation10 + $0x28] sm:$0xff]
        %v461 = vld [vmem:[#allocation10 + $0x30] sm:$0xff]
        %v462 = vld [vmem:[#allocation10 + $0x38] sm:$0xff]
        %v463 = vld [vmem:[#allocation10 + $0x40] sm:$0xff]
        %v464 = vld [vmem:[#allocation10 + $0x48] sm:$0xff]
        %v465 = vld [vmem:[#allocation10 + $0x50] sm:$0xff]
        %v466 = vld [vmem:[#allocation10 + $0x58] sm:$0xff]
        %v467 = vld [vmem:[#allocation10 + $0x60] sm:$0xff]
        %v468 = vld [vmem:[#allocation10 + $0x68] sm:$0xff]
        %v469 = vld [vmem:[#allocation10 + $0x70] sm:$0xff]
        %v470 = vld [vmem:[#allocation10 + $0x78] sm:$0xff]
        %v471 = vld [vmem:[#allocation10 + $0x80] sm:$0xff]
        %v472 = vld [vmem:[#allocation10 + $0x88] sm:$0xff]
        %v473 = vld [vmem:[#allocation10 + $0x90] sm:$0xff]
        %v474 = vld [vmem:[#allocation10 + $0x98] sm:$0xff]
        %v475 = vld [vmem:[#allocation10 + $0xa0] sm:$0xff]
        %v476 = vld [vmem:[#allocation10 + $0xa8] sm:$0xff]
        %v477 = vld [vmem:[#allocation10 + $0xb0] sm:$0xff]
        %v478 = vld [vmem:[#allocation10 + $0xb8] sm:$0xff]
        %v479 = vld [vmem:[#allocation10 + $0xc0] sm:$0xff]
        %v480 = vld [vmem:[#allocation10 + $0xc8] sm:$0xff]
        %v481 = vld [vmem:[#allocation10 + $0xd0] sm:$0xff]
        %v482 = vld [vmem:[#allocation10 + $0xd8] sm:$0xff]
        %v483 = vld [vmem:[#allocation10 + $0xe0] sm:$0xff]
        %v484 = vld [vmem:[#allocation10 + $0xe8] sm:$0xff]
        %v485 = vld [vmem:[#allocation10 + $0xf0] sm:$0xff]
        %v486 = vld [vmem:[#allocation10 + $0xf8] sm:$0xff]
        %v487 = vld [vmem:[#allocation10 + $0x100] sm:$0xff]
        %v488 = vld [vmem:[#allocation10 + $0x108] sm:$0xff]
        %v489 = vld [vmem:[#allocation10 + $0x110] sm:$0xff]
        %v490 = vld [vmem:[#allocation10 + $0x118] sm:$0xff]
        %v491 = vld [vmem:[#allocation10 + $0x120] sm:$0xff]
        %v492 = vld [vmem:[#allocation10 + $0x128] sm:$0xff]
        %v493 = vld [vmem:[#allocation10 + $0x130] sm:$0xff]
        %v494 = vld [vmem:[#allocation10 + $0x138] sm:$0xff]
        %v495 = vld [vmem:[#allocation10 + $0x140] sm:$0xff]
        %v496 = vld [vmem:[#allocation10 + $0x148] sm:$0xff]
        %v497 = vld [vmem:[#allocation10 + $0x150] sm:$0xff]
        %v498 = vld [vmem:[#allocation10 + $0x158] sm:$0xff]
        %v499 = vld [vmem:[#allocation10 + $0x160] sm:$0xff]
        %v500 = vld [vmem:[#allocation10 + $0x168] sm:$0xff]
        %v501 = vld [vmem:[#allocation10 + $0x170] sm:$0xff]
        %v502 = vld [vmem:[#allocation10 + $0x178] sm:$0xff]
        %v503 = vld [vmem:[#allocation10 + $0x180] sm:$0xff]
        %v504 = vld [vmem:[#allocation10 + $0x188] sm:$0xff]
        %v505 = vld [vmem:[#allocation10 + $0x190] sm:$0xff]
        %v506 = vld [vmem:[#allocation10 + $0x198] sm:$0xff]
        %v507 = vld [vmem:[#allocation10 + $0x1a0] sm:$0xff]
        %v508 = vld [vmem:[#allocation10 + $0x1a8] sm:$0xff]
        %v509 = vld [vmem:[#allocation10 + $0x1b0] sm:$0xff]
        %v510 = vld [vmem:[#allocation10 + $0x1b8] sm:$0xff]
        %v511 = vld [vmem:[#allocation10 + $0x1c0] sm:$0xff]
        %v512 = vld [vmem:[#allocation10 + $0x1c8] sm:$0xff]
        %v513 = vld [vmem:[#allocation10 + $0x1d0] sm:$0xff]
        %v514 = vld [vmem:[#allocation10 + $0x1d8] sm:$0xff]
        %v515 = vld [vmem:[#allocation10 + $0x1e0] sm:$0xff]
        %v516 = vld [vmem:[#allocation10 + $0x1e8] sm:$0xff]
        %v517 = vld [vmem:[#allocation10 + $0x1f0] sm:$0xff]
        %v518 = vld [vmem:[#allocation10 + $0x1f8] sm:$0xff]
        %v519 = vld [vmem:[%s384] sm:$0xff]
        %v520 = vld [vmem:[%s384 + $0x8] sm:$0xff]
        %v521 = vld [vmem:[%s384 + $0x10] sm:$0xff]
        %v522 = vld [vmem:[#allocation7] sm:$0xff]
        %v523 = vld [vmem:[#allocation7 + $0x8] sm:$0xff]
        %v524 = vld [vmem:[#allocation7 + $0x10] sm:$0xff]
        %v525 = vld [vmem:[#allocation7 + $0x18] sm:$0xff]
        %v526 = vld [vmem:[#allocation7 + $0x20] sm:$0xff]
        %v527 = vld [vmem:[#allocation7 + $0x28] sm:$0xff]
        %v528 = vld [vmem:[#allocation7 + $0x30] sm:$0xff]
        %v529 = vld [vmem:[#allocation7 + $0x38] sm:$0xff]
        %v530 = vld [vmem:[#allocation7 + $0x40] sm:$0xff]
        %v531 = vld [vmem:[#allocation7 + $0x48] sm:$0xff]
        %v532 = vld [vmem:[#allocation7 + $0x50] sm:$0xff]
        %v533 = vld [vmem:[#allocation7 + $0x58] sm:$0xff]
        %v534 = vld [vmem:[#allocation7 + $0x60] sm:$0xff]
        %v535 = vld [vmem:[#allocation7 + $0x68] sm:$0xff]
        %v536 = vld [vmem:[#allocation7 + $0x70] sm:$0xff]
        %v537 = vld [vmem:[#allocation7 + $0x78] sm:$0xff]
        %v538 = vld [vmem:[#allocation7 + $0x80] sm:$0xff]
        %v539 = vld [vmem:[#allocation7 + $0x88] sm:$0xff]
        %v540 = vld [vmem:[#allocation7 + $0x90] sm:$0xff]
        %v541 = vld [vmem:[#allocation7 + $0x98] sm:$0xff]
        %v542 = vld [vmem:[#allocation7 + $0xa0] sm:$0xff]
        %v543 = vld [vmem:[#allocation7 + $0xa8] sm:$0xff]
        %v544 = vld [vmem:[#allocation7 + $0xb0] sm:$0xff]
        %v545 = vld [vmem:[#allocation7 + $0xb8] sm:$0xff]
        %v546 = vld [vmem:[#allocation7 + $0xc0] sm:$0xff]
        %v547 = vld [vmem:[#allocation7 + $0xc8] sm:$0xff]
        %v548 = vld [vmem:[#allocation7 + $0xd0] sm:$0xff]
        %v549 = vld [vmem:[#allocation7 + $0xd8] sm:$0xff]
        %v550 = vld [vmem:[#allocation7 + $0xe0] sm:$0xff]
        %v551 = vld [vmem:[#allocation7 + $0xe8] sm:$0xff]
        %v552 = vld [vmem:[#allocation7 + $0xf0] sm:$0xff]
        %v553 = vld [vmem:[#allocation7 + $0xf8] sm:$0xff]
        %v554 = vld [vmem:[#allocation7 + $0x100] sm:$0xff]
        %v555 = vld [vmem:[#allocation7 + $0x108] sm:$0xff]
        %v556 = vld [vmem:[#allocation7 + $0x110] sm:$0xff]
        %v557 = vld [vmem:[#allocation7 + $0x118] sm:$0xff]
        %v558 = vld [vmem:[#allocation7 + $0x120] sm:$0xff]
        %v559 = vld [vmem:[#allocation7 + $0x128] sm:$0xff]
        %v560 = vld [vmem:[#allocation7 + $0x130] sm:$0xff]
        %v561 = vld [vmem:[#allocation7 + $0x138] sm:$0xff]
        %v562 = vld [vmem:[#allocation7 + $0x140] sm:$0xff]
        %v563 = vld [vmem:[#allocation7 + $0x148] sm:$0xff]
        %v564 = vld [vmem:[#allocation7 + $0x150] sm:$0xff]
        %v565 = vld [vmem:[#allocation7 + $0x158] sm:$0xff]
        %v566 = vld [vmem:[#allocation7 + $0x160] sm:$0xff]
        %v567 = vld [vmem:[#allocation7 + $0x168] sm:$0xff]
        %v568 = vld [vmem:[#allocation7 + $0x170] sm:$0xff]
        %v569 = vld [vmem:[#allocation7 + $0x178] sm:$0xff]
        %v570 = vld [vmem:[#allocation7 + $0x180] sm:$0xff]
        %v571 = vld [vmem:[#allocation7 + $0x188] sm:$0xff]
        %v572 = vld [vmem:[#allocation7 + $0x190] sm:$0xff]
        %v573 = vld [vmem:[#allocation7 + $0x198] sm:$0xff]
        %v574 = vld [vmem:[#allocation7 + $0x1a0] sm:$0xff]
        %v575 = vld [vmem:[#allocation7 + $0x1a8] sm:$0xff]
        %v576 = vld [vmem:[#allocation7 + $0x1b0] sm:$0xff]
        %v577 = vld [vmem:[#allocation7 + $0x1b8] sm:$0xff]
        %v578 = vld [vmem:[#allocation7 + $0x1c0] sm:$0xff]
        %v579 = vld [vmem:[#allocation7 + $0x1c8] sm:$0xff]
        %v580 = vld [vmem:[#allocation7 + $0x1d0] sm:$0xff]
        %v581 = vld [vmem:[#allocation7 + $0x1d8] sm:$0xff]
        %v582 = vld [vmem:[#allocation7 + $0x1e0] sm:$0xff]
        %v583 = vld [vmem:[#allocation7 + $0x1e8] sm:$0xff]
        %v584 = vld [vmem:[#allocation7 + $0x1f0] sm:$0xff]
        %v585 = vld [vmem:[#allocation7 + $0x1f8] sm:$0xff]
        %v586 = vld [vmem:[#allocation7 + $0x200] sm:$0xff]
        %v587 = vld [vmem:[#allocation7 + $0x208] sm:$0xff]
        %v588 = vld [vmem:[#allocation7 + $0x210] sm:$0xff]
        %v589 = vld [vmem:[#allocation7 + $0x218] sm:$0xff]
        %vm590 = vcmask 130048
        %v592 = vsel %vm590, %v521, 0
        %594 = vmatpush.msra.mxu0 %v552
        %595 = vmatpush.msra.mxu0 %v550
        %596 = vmatpush.msra.mxu0 %v548
        %597 = vmatpush.msra.mxu0 %v546
        %598 = vmatpush.msra.mxu0 %v544
        %599 = vmatpush.msra.mxu0 %v542
        %600 = vmatpush.msra.mxu0 %v540
        %601 = vmatpush.msra.mxu0 %v538
        %602 = vmatpush.msra.mxu0 %v536
        %603 = vmatpush.msra.mxu0 %v534
        %604 = vmatpush.msra.mxu0 %v532
        %605 = vmatpush.msra.mxu0 %v530
        %606 = vmatpush.msra.mxu0 %v528
        %607 = vmatpush.msra.mxu0 %v526
        %608 = vmatpush.msra.mxu0 %v524
        %609 = vmatpush.msra.mxu0 %v522
        %610 = vmatmul.f32.gmra.mxu0 %v519
        %v611 = vpop.f32.mrf.mxu0
        %v612 = vadd.f32 0.0, %v611
        %613 = vdwg.mxu0
        %614 = vmatpush.msra.mxu0 %v584
        %615 = vmatpush.msra.mxu0 %v582
        %616 = vmatpush.msra.mxu0 %v580
        %617 = vmatpush.msra.mxu0 %v578
        %618 = vmatpush.msra.mxu0 %v576
        %619 = vmatpush.msra.mxu0 %v574
        %620 = vmatpush.msra.mxu0 %v572
        %621 = vmatpush.msra.mxu0 %v570
        %622 = vmatpush.msra.mxu0 %v568
        %623 = vmatpush.msra.mxu0 %v566
        %624 = vmatpush.msra.mxu0 %v564
        %625 = vmatpush.msra.mxu0 %v562
        %626 = vmatpush.msra.mxu0 %v560
        %627 = vmatpush.msra.mxu0 %v558
        %628 = vmatpush.msra.mxu0 %v556
        %629 = vmatpush.msra.mxu0 %v554
        %630 = vmatmul.f32.gmra.mxu0 %v520
        %v631 = vpop.f32.mrf.mxu0
        %v632 = vadd.f32 %v612, %v631
        %633 = vdwg.mxu0
        %634 = vmatpush.msra.mxu0 0.0
        %635 = vmatpush.msra.mxu0 0.0
        %636 = vmatpush.msra.mxu0 0.0
        %637 = vmatpush.msra.mxu0 0.0
        %638 = vmatpush.msra.mxu0 0.0
        %639 = vmatpush.msra.mxu0 0.0
        %640 = vmatpush.msra.mxu0 0.0
        %641 = vmatpush.msra.mxu0 0.0
        %642 = vmatpush.msra.mxu0 0.0
        %643 = vmatpush.msra.mxu0 0.0
        %644 = vmatpush.msra.mxu0 0.0
        %645 = vmatpush.msra.mxu0 0.0
        %646 = vmatpush.msra.mxu0 0.0
        %647 = vmatpush.msra.mxu0 0.0
        %648 = vmatpush.msra.mxu0 %v588
        %649 = vmatpush.msra.mxu0 %v586
        %650 = vmatmul.f32.gmra.mxu0 %v592
        %v651 = vpop.f32.mrf.mxu0
        %v652 = vadd.f32 %v632, %v651
        %653 = vdwg.mxu0
        %654 = vmatpush.msra.mxu0 %v553
        %655 = vmatpush.msra.mxu0 %v551
        %656 = vmatpush.msra.mxu0 %v549
        %657 = vmatpush.msra.mxu0 %v547
        %658 = vmatpush.msra.mxu0 %v545
        %659 = vmatpush.msra.mxu0 %v543
        %660 = vmatpush.msra.mxu0 %v541
        %661 = vmatpush.msra.mxu0 %v539
        %662 = vmatpush.msra.mxu0 %v537
        %663 = vmatpush.msra.mxu0 %v535
        %664 = vmatpush.msra.mxu0 %v533
        %665 = vmatpush.msra.mxu0 %v531
        %666 = vmatpush.msra.mxu0 %v529
        %667 = vmatpush.msra.mxu0 %v527
        %668 = vmatpush.msra.mxu0 %v525
        %669 = vmatpush.msra.mxu0 %v523
        %670 = vmatmul.f32.gmra.mxu0 %v519
        %v671 = vpop.f32.mrf.mxu0
        %v672 = vadd.f32 0.0, %v671
        %673 = vdwg.mxu0
        %674 = vmatpush.msra.mxu0 %v585
        %675 = vmatpush.msra.mxu0 %v583
        %676 = vmatpush.msra.mxu0 %v581
        %677 = vmatpush.msra.mxu0 %v579
        %678 = vmatpush.msra.mxu0 %v577
        %679 = vmatpush.msra.mxu0 %v575
        %680 = vmatpush.msra.mxu0 %v573
        %681 = vmatpush.msra.mxu0 %v571
        %682 = vmatpush.msra.mxu0 %v569
        %683 = vmatpush.msra.mxu0 %v567
        %684 = vmatpush.msra.mxu0 %v565
        %685 = vmatpush.msra.mxu0 %v563
        %686 = vmatpush.msra.mxu0 %v561
        %687 = vmatpush.msra.mxu0 %v559
        %688 = vmatpush.msra.mxu0 %v557
        %689 = vmatpush.msra.mxu0 %v555
        %690 = vmatmul.f32.gmra.mxu0 %v520
        %v691 = vpop.f32.mrf.mxu0
        %v692 = vadd.f32 %v672, %v691
        %693 = vdwg.mxu0
        %694 = vmatpush.msra.mxu0 0.0
        %695 = vmatpush.msra.mxu0 0.0
        %696 = vmatpush.msra.mxu0 0.0
        %697 = vmatpush.msra.mxu0 0.0
        %698 = vmatpush.msra.mxu0 0.0
        %699 = vmatpush.msra.mxu0 0.0
        %700 = vmatpush.msra.mxu0 0.0
        %701 = vmatpush.msra.mxu0 0.0
        %702 = vmatpush.msra.mxu0 0.0
        %703 = vmatpush.msra.mxu0 0.0
        %704 = vmatpush.msra.mxu0 0.0
        %705 = vmatpush.msra.mxu0 0.0
        %706 = vmatpush.msra.mxu0 0.0
        %707 = vmatpush.msra.mxu0 0.0
        %708 = vmatpush.msra.mxu0 %v589
        %709 = vmatpush.msra.mxu0 %v587
        %710 = vmatmul.f32.gmra.mxu0 %v592
        %v711 = vpop.f32.mrf.mxu0
        %v712 = vadd.f32 %v692, %v711
        %713 = vdwg.mxu0
        %v714 = vld [vmem:[%s5] sm:$0x3]
        %v715 = vld [vmem:[%s6] sm:$0x3]
        %716 = vmatpush.msra.mxu0 %v485
        %717 = vmatpush.msra.mxu0 %v483
        %718 = vmatpush.msra.mxu0 %v481
        %719 = vmatpush.msra.mxu0 %v479
        %720 = vmatpush.msra.mxu0 %v477
        %721 = vmatpush.msra.mxu0 %v475
        %722 = vmatpush.msra.mxu0 %v473
        %723 = vmatpush.msra.mxu0 %v471
        %724 = vmatpush.msra.mxu0 %v469
        %725 = vmatpush.msra.mxu0 %v467
        %726 = vmatpush.msra.mxu0 %v465
        %727 = vmatpush.msra.mxu0 %v463
        %728 = vmatpush.msra.mxu0 %v461
        %729 = vmatpush.msra.mxu0 %v459
        %730 = vmatpush.msra.mxu0 %v457
        %731 = vmatpush.msra.mxu0 %v455
        %732 = vmatmul.f32.gmra.mxu0 %v652
        %v733 = vpop.f32.mrf.mxu0
        %v734 = vadd.f32 0.0, %v733
        %735 = vdwg.mxu0
        %736 = vmatpush.msra.mxu0 %v517
        %737 = vmatpush.msra.mxu0 %v515
        %738 = vmatpush.msra.mxu0 %v513
        %739 = vmatpush.msra.mxu0 %v511
        %740 = vmatpush.msra.mxu0 %v509
        %741 = vmatpush.msra.mxu0 %v507
        %742 = vmatpush.msra.mxu0 %v505
        %743 = vmatpush.msra.mxu0 %v503
        %744 = vmatpush.msra.mxu0 %v501
        %745 = vmatpush.msra.mxu0 %v499
        %746 = vmatpush.msra.mxu0 %v497
        %747 = vmatpush.msra.mxu0 %v495
        %748 = vmatpush.msra.mxu0 %v493
        %749 = vmatpush.msra.mxu0 %v491
        %750 = vmatpush.msra.mxu0 %v489
        %751 = vmatpush.msra.mxu0 %v487
        %752 = vmatmul.f32.gmra.mxu0 %v712
        %v753 = vpop.f32.mrf.mxu0
        %v754 = vadd.f32 %v734, %v753
        %755 = vdwg.mxu0
        %756 = vmatpush.msra.mxu0 %v486
        %757 = vmatpush.msra.mxu0 %v484
        %758 = vmatpush.msra.mxu0 %v482
        %759 = vmatpush.msra.mxu0 %v480
        %760 = vmatpush.msra.mxu0 %v478
        %761 = vmatpush.msra.mxu0 %v476
        %762 = vmatpush.msra.mxu0 %v474
        %763 = vmatpush.msra.mxu0 %v472
        %764 = vmatpush.msra.mxu0 %v470
        %765 = vmatpush.msra.mxu0 %v468
        %766 = vmatpush.msra.mxu0 %v466
        %767 = vmatpush.msra.mxu0 %v464
        %768 = vmatpush.msra.mxu0 %v462
        %769 = vmatpush.msra.mxu0 %v460
        %770 = vmatpush.msra.mxu0 %v458
        %771 = vmatpush.msra.mxu0 %v456
        %772 = vmatmul.f32.gmra.mxu0 %v652
        %v773 = vpop.f32.mrf.mxu0
        %v774 = vadd.f32 0.0, %v773
        %775 = vdwg.mxu0
        %776 = vmatpush.msra.mxu0 %v518
        %777 = vmatpush.msra.mxu0 %v516
        %778 = vmatpush.msra.mxu0 %v514
        %779 = vmatpush.msra.mxu0 %v512
        %780 = vmatpush.msra.mxu0 %v510
        %781 = vmatpush.msra.mxu0 %v508
        %782 = vmatpush.msra.mxu0 %v506
        %783 = vmatpush.msra.mxu0 %v504
        %784 = vmatpush.msra.mxu0 %v502
        %785 = vmatpush.msra.mxu0 %v500
        %786 = vmatpush.msra.mxu0 %v498
        %787 = vmatpush.msra.mxu0 %v496
        %788 = vmatpush.msra.mxu0 %v494
        %789 = vmatpush.msra.mxu0 %v492
        %790 = vmatpush.msra.mxu0 %v490
        %791 = vmatpush.msra.mxu0 %v488
        %792 = vmatmul.f32.gmra.mxu0 %v712
        %v793 = vpop.f32.mrf.mxu0
        %v794 = vadd.f32 %v774, %v793
        %795 = vdwg.mxu0
        %v796 = vsub.f32 %v652, %v754
        %v797 = vsub.f32 %v712, %v794
        %v798 = vmul.f32 %v796, %v796
        %v799 = vmul.f32 %v797, %v797
        %800 = vmatpush.msra.mxu0 %v485
        %801 = vmatpush.msra.mxu0 %v483
        %802 = vmatpush.msra.mxu0 %v481
        %803 = vmatpush.msra.mxu0 %v479
        %804 = vmatpush.msra.mxu0 %v477
        %805 = vmatpush.msra.mxu0 %v475
        %806 = vmatpush.msra.mxu0 %v473
        %807 = vmatpush.msra.mxu0 %v471
        %808 = vmatpush.msra.mxu0 %v469
        %809 = vmatpush.msra.mxu0 %v467
        %810 = vmatpush.msra.mxu0 %v465
        %811 = vmatpush.msra.mxu0 %v463
        %812 = vmatpush.msra.mxu0 %v461
        %813 = vmatpush.msra.mxu0 %v459
        %814 = vmatpush.msra.mxu0 %v457
        %815 = vmatpush.msra.mxu0 %v455
        %816 = vmatmul.f32.gmra.mxu0 %v798
        %v817 = vpop.f32.mrf.mxu0
        %v818 = vadd.f32 1e-05, %v817
        %819 = vdwg.mxu0
        %820 = vmatpush.msra.mxu0 %v517
        %821 = vmatpush.msra.mxu0 %v515
        %822 = vmatpush.msra.mxu0 %v513
        %823 = vmatpush.msra.mxu0 %v511
        %824 = vmatpush.msra.mxu0 %v509
        %825 = vmatpush.msra.mxu0 %v507
        %826 = vmatpush.msra.mxu0 %v505
        %827 = vmatpush.msra.mxu0 %v503
        %828 = vmatpush.msra.mxu0 %v501
        %829 = vmatpush.msra.mxu0 %v499
        %830 = vmatpush.msra.mxu0 %v497
        %831 = vmatpush.msra.mxu0 %v495
        %832 = vmatpush.msra.mxu0 %v493
        %833 = vmatpush.msra.mxu0 %v491
        %834 = vmatpush.msra.mxu0 %v489
        %835 = vmatpush.msra.mxu0 %v487
        %836 = vmatmul.f32.gmra.mxu0 %v799
        %v837 = vpop.f32.mrf.mxu0
        %v838 = vadd.f32 %v818, %v837
        %839 = vdwg.mxu0
        %840 = vmatpush.msra.mxu0 %v486
        %841 = vmatpush.msra.mxu0 %v484
        %842 = vmatpush.msra.mxu0 %v482
        %843 = vmatpush.msra.mxu0 %v480
        %844 = vmatpush.msra.mxu0 %v478
        %845 = vmatpush.msra.mxu0 %v476
        %846 = vmatpush.msra.mxu0 %v474
        %847 = vmatpush.msra.mxu0 %v472
        %848 = vmatpush.msra.mxu0 %v470
        %849 = vmatpush.msra.mxu0 %v468
        %850 = vmatpush.msra.mxu0 %v466
        %851 = vmatpush.msra.mxu0 %v464
        %852 = vmatpush.msra.mxu0 %v462
        %853 = vmatpush.msra.mxu0 %v460
        %854 = vmatpush.msra.mxu0 %v458
        %855 = vmatpush.msra.mxu0 %v456
        %856 = vmatmul.f32.gmra.mxu0 %v798
        %v857 = vpop.f32.mrf.mxu0
        %v858 = vadd.f32 1e-05, %v857
        %859 = vdwg.mxu0
        %860 = vmatpush.msra.mxu0 %v518
        %861 = vmatpush.msra.mxu0 %v516
        %862 = vmatpush.msra.mxu0 %v514
        %863 = vmatpush.msra.mxu0 %v512
        %864 = vmatpush.msra.mxu0 %v510
        %865 = vmatpush.msra.mxu0 %v508
        %866 = vmatpush.msra.mxu0 %v506
        %867 = vmatpush.msra.mxu0 %v504
        %868 = vmatpush.msra.mxu0 %v502
        %869 = vmatpush.msra.mxu0 %v500
        %870 = vmatpush.msra.mxu0 %v498
        %871 = vmatpush.msra.mxu0 %v496
        %872 = vmatpush.msra.mxu0 %v494
        %873 = vmatpush.msra.mxu0 %v492
        %874 = vmatpush.msra.mxu0 %v490
        %875 = vmatpush.msra.mxu0 %v488
        %876 = vmatmul.f32.gmra.mxu0 %v799
        %v877 = vpop.f32.mrf.mxu0
        %v878 = vadd.f32 %v858, %v877
        %879 = vdwg.mxu0
        %v880 = vrsqrt.pop %v838
        %v881 = vmul.f32 %v880, %v838
        %v882 = vmul.f32 %v881, %v880
        %v883 = vmul.f32 0.5, %v882
        %v884 = vsub.f32 1.5, %v883
        %v885 = vmul.f32 %v880, %v884
        %vm886 = vweird.f32 %v838
        %vm887 = vweird.f32 %v880
        %vm888 = vmor %vm886, %vm887
        %v889 = vsel %vm888, %v880, %v885
        %v890 = vrsqrt.pop %v878
        %v891 = vmul.f32 %v890, %v878
        %v892 = vmul.f32 %v891, %v890
        %v893 = vmul.f32 0.5, %v892
        %v894 = vsub.f32 1.5, %v893
        %v895 = vmul.f32 %v890, %v894
        %vm896 = vweird.f32 %v878
        %vm897 = vweird.f32 %v890
        %vm898 = vmor %vm896, %vm897
        %v899 = vsel %vm898, %v890, %v895
        %v900 = vmul.f32 %v796, %v889
        %v901 = vmul.f32 %v797, %v899
        %v903 = vperm.slane %v714, 0
        %v904 = vperm.slane %v714, 1
        %v907 = vmul.f32 %v900, %v903
        %v908 = vmul.f32 %v901, %v904
        %v910 = vperm.slane %v715, 0
        %v911 = vperm.slane %v715, 1
        %v914 = vadd.f32 %v907, %v910
        %v915 = vadd.f32 %v908, %v911
        %v916 = vmax.f32 %v914, 0.0
        %v917 = vmax.f32 %v915, 0.0
        %v918 = vld [vmem:[#allocation8] sm:$0xff]
        %v919 = vld [vmem:[#allocation8 + $0x8] sm:$0xff]
        %v920 = vld [vmem:[#allocation8 + $0x10] sm:$0xff]
        %v921 = vld [vmem:[#allocation8 + $0x18] sm:$0xff]
        %v922 = vld [vmem:[#allocation8 + $0x20] sm:$0xff]
        %v923 = vld [vmem:[#allocation8 + $0x28] sm:$0xff]
        %v924 = vld [vmem:[#allocation8 + $0x30] sm:$0xff]
        %v925 = vld [vmem:[#allocation8 + $0x38] sm:$0xff]
        %v926 = vld [vmem:[#allocation8 + $0x40] sm:$0xff]
        %v927 = vld [vmem:[#allocation8 + $0x48] sm:$0xff]
        %v928 = vld [vmem:[#allocation8 + $0x50] sm:$0xff]
        %v929 = vld [vmem:[#allocation8 + $0x58] sm:$0xff]
        %v930 = vld [vmem:[#allocation8 + $0x60] sm:$0xff]
        %v931 = vld [vmem:[#allocation8 + $0x68] sm:$0xff]
        %v932 = vld [vmem:[#allocation8 + $0x70] sm:$0xff]
        %v933 = vld [vmem:[#allocation8 + $0x78] sm:$0xff]
        %v934 = vld [vmem:[#allocation8 + $0x80] sm:$0xff]
        %v935 = vld [vmem:[#allocation8 + $0x88] sm:$0xff]
        %v936 = vld [vmem:[#allocation8 + $0x90] sm:$0xff]
        %v937 = vld [vmem:[#allocation8 + $0x98] sm:$0xff]
        %v938 = vld [vmem:[#allocation8 + $0xa0] sm:$0xff]
        %v939 = vld [vmem:[#allocation8 + $0xa8] sm:$0xff]
        %v940 = vld [vmem:[#allocation8 + $0xb0] sm:$0xff]
        %v941 = vld [vmem:[#allocation8 + $0xb8] sm:$0xff]
        %v942 = vld [vmem:[#allocation8 + $0xc0] sm:$0xff]
        %v943 = vld [vmem:[#allocation8 + $0xc8] sm:$0xff]
        %v944 = vld [vmem:[#allocation8 + $0xd0] sm:$0xff]
        %v945 = vld [vmem:[#allocation8 + $0xd8] sm:$0xff]
        %v946 = vld [vmem:[#allocation8 + $0xe0] sm:$0xff]
        %v947 = vld [vmem:[#allocation8 + $0xe8] sm:$0xff]
        %v948 = vld [vmem:[#allocation8 + $0xf0] sm:$0xff]
        %v949 = vld [vmem:[#allocation8 + $0xf8] sm:$0xff]
        %v950 = vld [vmem:[#allocation8 + $0x100] sm:$0xff]
        %v951 = vld [vmem:[#allocation8 + $0x108] sm:$0xff]
        %v952 = vld [vmem:[#allocation8 + $0x110] sm:$0xff]
        %v953 = vld [vmem:[#allocation8 + $0x118] sm:$0xff]
        %v954 = vld [vmem:[#allocation8 + $0x120] sm:$0xff]
        %v955 = vld [vmem:[#allocation8 + $0x128] sm:$0xff]
        %v956 = vld [vmem:[#allocation8 + $0x130] sm:$0xff]
        %v957 = vld [vmem:[#allocation8 + $0x138] sm:$0xff]
        %v958 = vld [vmem:[#allocation8 + $0x140] sm:$0xff]
        %v959 = vld [vmem:[#allocation8 + $0x148] sm:$0xff]
        %v960 = vld [vmem:[#allocation8 + $0x150] sm:$0xff]
        %v961 = vld [vmem:[#allocation8 + $0x158] sm:$0xff]
        %v962 = vld [vmem:[#allocation8 + $0x160] sm:$0xff]
        %v963 = vld [vmem:[#allocation8 + $0x168] sm:$0xff]
        %v964 = vld [vmem:[#allocation8 + $0x170] sm:$0xff]
        %v965 = vld [vmem:[#allocation8 + $0x178] sm:$0xff]
        %v966 = vld [vmem:[#allocation8 + $0x180] sm:$0xff]
        %v967 = vld [vmem:[#allocation8 + $0x188] sm:$0xff]
        %v968 = vld [vmem:[#allocation8 + $0x190] sm:$0xff]
        %v969 = vld [vmem:[#allocation8 + $0x198] sm:$0xff]
        %v970 = vld [vmem:[#allocation8 + $0x1a0] sm:$0xff]
        %v971 = vld [vmem:[#allocation8 + $0x1a8] sm:$0xff]
        %v972 = vld [vmem:[#allocation8 + $0x1b0] sm:$0xff]
        %v973 = vld [vmem:[#allocation8 + $0x1b8] sm:$0xff]
        %v974 = vld [vmem:[#allocation8 + $0x1c0] sm:$0xff]
        %v975 = vld [vmem:[#allocation8 + $0x1c8] sm:$0xff]
        %v976 = vld [vmem:[#allocation8 + $0x1d0] sm:$0xff]
        %v977 = vld [vmem:[#allocation8 + $0x1d8] sm:$0xff]
        %v978 = vld [vmem:[#allocation8 + $0x1e0] sm:$0xff]
        %v979 = vld [vmem:[#allocation8 + $0x1e8] sm:$0xff]
        %v980 = vld [vmem:[#allocation8 + $0x1f0] sm:$0xff]
        %v981 = vld [vmem:[#allocation8 + $0x1f8] sm:$0xff]
        %982 = vmatpush.msra.mxu0 %v948
        %983 = vmatpush.msra.mxu0 %v946
        %984 = vmatpush.msra.mxu0 %v944
        %985 = vmatpush.msra.mxu0 %v942
        %986 = vmatpush.msra.mxu0 %v940
        %987 = vmatpush.msra.mxu0 %v938
        %988 = vmatpush.msra.mxu0 %v936
        %989 = vmatpush.msra.mxu0 %v934
        %990 = vmatpush.msra.mxu0 %v932
        %991 = vmatpush.msra.mxu0 %v930
        %992 = vmatpush.msra.mxu0 %v928
        %993 = vmatpush.msra.mxu0 %v926
        %994 = vmatpush.msra.mxu0 %v924
        %995 = vmatpush.msra.mxu0 %v922
        %996 = vmatpush.msra.mxu0 %v920
        %997 = vmatpush.msra.mxu0 %v918
        %998 = vmatmul.f32.gmra.mxu0 %v916
        %v999 = vpop.f32.mrf.mxu0
        %v1000 = vadd.f32 0.0, %v999
        %1001 = vdwg.mxu0
        %1002 = vmatpush.msra.mxu0 %v980
        %1003 = vmatpush.msra.mxu0 %v978
        %1004 = vmatpush.msra.mxu0 %v976
        %1005 = vmatpush.msra.mxu0 %v974
        %1006 = vmatpush.msra.mxu0 %v972
        %1007 = vmatpush.msra.mxu0 %v970
        %1008 = vmatpush.msra.mxu0 %v968
        %1009 = vmatpush.msra.mxu0 %v966
        %1010 = vmatpush.msra.mxu0 %v964
        %1011 = vmatpush.msra.mxu0 %v962
        %1012 = vmatpush.msra.mxu0 %v960
        %1013 = vmatpush.msra.mxu0 %v958
        %1014 = vmatpush.msra.mxu0 %v956
        %1015 = vmatpush.msra.mxu0 %v954
        %1016 = vmatpush.msra.mxu0 %v952
        %1017 = vmatpush.msra.mxu0 %v950
        %1018 = vmatmul.f32.gmra.mxu0 %v917
        %v1019 = vpop.f32.mrf.mxu0
        %v1020 = vadd.f32 %v1000, %v1019
        %1021 = vdwg.mxu0
        %1022 = vmatpush.msra.mxu0 %v949
        %1023 = vmatpush.msra.mxu0 %v947
        %1024 = vmatpush.msra.mxu0 %v945
        %1025 = vmatpush.msra.mxu0 %v943
        %1026 = vmatpush.msra.mxu0 %v941
        %1027 = vmatpush.msra.mxu0 %v939
        %1028 = vmatpush.msra.mxu0 %v937
        %1029 = vmatpush.msra.mxu0 %v935
        %1030 = vmatpush.msra.mxu0 %v933
        %1031 = vmatpush.msra.mxu0 %v931
        %1032 = vmatpush.msra.mxu0 %v929
        %1033 = vmatpush.msra.mxu0 %v927
        %1034 = vmatpush.msra.mxu0 %v925
        %1035 = vmatpush.msra.mxu0 %v923
        %1036 = vmatpush.msra.mxu0 %v921
        %1037 = vmatpush.msra.mxu0 %v919
        %1038 = vmatmul.f32.gmra.mxu0 %v916
        %v1039 = vpop.f32.mrf.mxu0
        %v1040 = vadd.f32 0.0, %v1039
        %1041 = vdwg.mxu0
        %1042 = vmatpush.msra.mxu0 %v981
        %1043 = vmatpush.msra.mxu0 %v979
        %1044 = vmatpush.msra.mxu0 %v977
        %1045 = vmatpush.msra.mxu0 %v975
        %1046 = vmatpush.msra.mxu0 %v973
        %1047 = vmatpush.msra.mxu0 %v971
        %1048 = vmatpush.msra.mxu0 %v969
        %1049 = vmatpush.msra.mxu0 %v967
        %1050 = vmatpush.msra.mxu0 %v965
        %1051 = vmatpush.msra.mxu0 %v963
        %1052 = vmatpush.msra.mxu0 %v961
        %1053 = vmatpush.msra.mxu0 %v959
        %1054 = vmatpush.msra.mxu0 %v957
        %1055 = vmatpush.msra.mxu0 %v955
        %1056 = vmatpush.msra.mxu0 %v953
        %1057 = vmatpush.msra.mxu0 %v951
        %1058 = vmatmul.f32.gmra.mxu0 %v917
        %v1059 = vpop.f32.mrf.mxu0
        %v1060 = vadd.f32 %v1040, %v1059
        %1061 = vdwg.mxu0
        %v1062 = vld [vmem:[%s7] sm:$0x3]
        %v1063 = vld [vmem:[#allocation11] sm:$0x3]
        %1064 = vmatpush.msra.mxu0 %v485
        %1065 = vmatpush.msra.mxu0 %v483
        %1066 = vmatpush.msra.mxu0 %v481
        %1067 = vmatpush.msra.mxu0 %v479
        %1068 = vmatpush.msra.mxu0 %v477
        %1069 = vmatpush.msra.mxu0 %v475
        %1070 = vmatpush.msra.mxu0 %v473
        %1071 = vmatpush.msra.mxu0 %v471
        %1072 = vmatpush.msra.mxu0 %v469
        %1073 = vmatpush.msra.mxu0 %v467
        %1074 = vmatpush.msra.mxu0 %v465
        %1075 = vmatpush.msra.mxu0 %v463
        %1076 = vmatpush.msra.mxu0 %v461
        %1077 = vmatpush.msra.mxu0 %v459
        %1078 = vmatpush.msra.mxu0 %v457
        %1079 = vmatpush.msra.mxu0 %v455
        %1080 = vmatmul.f32.gmra.mxu0 %v1020
        %v1081 = vpop.f32.mrf.mxu0
        %v1082 = vadd.f32 0.0, %v1081
        %1083 = vdwg.mxu0
        %1084 = vmatpush.msra.mxu0 %v517
        %1085 = vmatpush.msra.mxu0 %v515
        %1086 = vmatpush.msra.mxu0 %v513
        %1087 = vmatpush.msra.mxu0 %v511
        %1088 = vmatpush.msra.mxu0 %v509
        %1089 = vmatpush.msra.mxu0 %v507
        %1090 = vmatpush.msra.mxu0 %v505
        %1091 = vmatpush.msra.mxu0 %v503
        %1092 = vmatpush.msra.mxu0 %v501
        %1093 = vmatpush.msra.mxu0 %v499
        %1094 = vmatpush.msra.mxu0 %v497
        %1095 = vmatpush.msra.mxu0 %v495
        %1096 = vmatpush.msra.mxu0 %v493
        %1097 = vmatpush.msra.mxu0 %v491
        %1098 = vmatpush.msra.mxu0 %v489
        %1099 = vmatpush.msra.mxu0 %v487
        %1100 = vmatmul.f32.gmra.mxu0 %v1060
        %v1101 = vpop.f32.mrf.mxu0
        %v1102 = vadd.f32 %v1082, %v1101
        %1103 = vdwg.mxu0
        %1104 = vmatpush.msra.mxu0 %v486
        %1105 = vmatpush.msra.mxu0 %v484
        %1106 = vmatpush.msra.mxu0 %v482
        %1107 = vmatpush.msra.mxu0 %v480
        %1108 = vmatpush.msra.mxu0 %v478
        %1109 = vmatpush.msra.mxu0 %v476
        %1110 = vmatpush.msra.mxu0 %v474
        %1111 = vmatpush.msra.mxu0 %v472
        %1112 = vmatpush.msra.mxu0 %v470
        %1113 = vmatpush.msra.mxu0 %v468
        %1114 = vmatpush.msra.mxu0 %v466
        %1115 = vmatpush.msra.mxu0 %v464
        %1116 = vmatpush.msra.mxu0 %v462
        %1117 = vmatpush.msra.mxu0 %v460
        %1118 = vmatpush.msra.mxu0 %v458
        %1119 = vmatpush.msra.mxu0 %v456
        %1120 = vmatmul.f32.gmra.mxu0 %v1020
        %v1121 = vpop.f32.mrf.mxu0
        %v1122 = vadd.f32 0.0, %v1121
        %1123 = vdwg.mxu0
        %1124 = vmatpush.msra.mxu0 %v518
        %1125 = vmatpush.msra.mxu0 %v516
        %1126 = vmatpush.msra.mxu0 %v514
        %1127 = vmatpush.msra.mxu0 %v512
        %1128 = vmatpush.msra.mxu0 %v510
        %1129 = vmatpush.msra.mxu0 %v508
        %1130 = vmatpush.msra.mxu0 %v506
        %1131 = vmatpush.msra.mxu0 %v504
        %1132 = vmatpush.msra.mxu0 %v502
        %1133 = vmatpush.msra.mxu0 %v500
        %1134 = vmatpush.msra.mxu0 %v498
        %1135 = vmatpush.msra.mxu0 %v496
        %1136 = vmatpush.msra.mxu0 %v494
        %1137 = vmatpush.msra.mxu0 %v492
        %1138 = vmatpush.msra.mxu0 %v490
        %1139 = vmatpush.msra.mxu0 %v488
        %1140 = vmatmul.f32.gmra.mxu0 %v1060
        %v1141 = vpop.f32.mrf.mxu0
        %v1142 = vadd.f32 %v1122, %v1141
        %1143 = vdwg.mxu0
        %v1144 = vsub.f32 %v1020, %v1102
        %v1145 = vsub.f32 %v1060, %v1142
        %v1146 = vmul.f32 %v1144, %v1144
        %v1147 = vmul.f32 %v1145, %v1145
        %1148 = vmatpush.msra.mxu0 %v485
        %1149 = vmatpush.msra.mxu0 %v483
        %1150 = vmatpush.msra.mxu0 %v481
        %1151 = vmatpush.msra.mxu0 %v479
        %1152 = vmatpush.msra.mxu0 %v477
        %1153 = vmatpush.msra.mxu0 %v475
        %1154 = vmatpush.msra.mxu0 %v473
        %1155 = vmatpush.msra.mxu0 %v471
        %1156 = vmatpush.msra.mxu0 %v469
        %1157 = vmatpush.msra.mxu0 %v467
        %1158 = vmatpush.msra.mxu0 %v465
        %1159 = vmatpush.msra.mxu0 %v463
        %1160 = vmatpush.msra.mxu0 %v461
        %1161 = vmatpush.msra.mxu0 %v459
        %1162 = vmatpush.msra.mxu0 %v457
        %1163 = vmatpush.msra.mxu0 %v455
        %1164 = vmatmul.f32.gmra.mxu0 %v1146
        %v1165 = vpop.f32.mrf.mxu0
        %v1166 = vadd.f32 1e-05, %v1165
        %1167 = vdwg.mxu0
        %1168 = vmatpush.msra.mxu0 %v517
        %1169 = vmatpush.msra.mxu0 %v515
        %1170 = vmatpush.msra.mxu0 %v513
        %1171 = vmatpush.msra.mxu0 %v511
        %1172 = vmatpush.msra.mxu0 %v509
        %1173 = vmatpush.msra.mxu0 %v507
        %1174 = vmatpush.msra.mxu0 %v505
        %1175 = vmatpush.msra.mxu0 %v503
        %1176 = vmatpush.msra.mxu0 %v501
        %1177 = vmatpush.msra.mxu0 %v499
        %1178 = vmatpush.msra.mxu0 %v497
        %1179 = vmatpush.msra.mxu0 %v495
        %1180 = vmatpush.msra.mxu0 %v493
        %1181 = vmatpush.msra.mxu0 %v491
        %1182 = vmatpush.msra.mxu0 %v489
        %1183 = vmatpush.msra.mxu0 %v487
        %1184 = vmatmul.f32.gmra.mxu0 %v1147
        %v1185 = vpop.f32.mrf.mxu0
        %v1186 = vadd.f32 %v1166, %v1185
        %1187 = vdwg.mxu0
        %1188 = vmatpush.msra.mxu0 %v486
        %1189 = vmatpush.msra.mxu0 %v484
        %1190 = vmatpush.msra.mxu0 %v482
        %1191 = vmatpush.msra.mxu0 %v480
        %1192 = vmatpush.msra.mxu0 %v478
        %1193 = vmatpush.msra.mxu0 %v476
        %1194 = vmatpush.msra.mxu0 %v474
        %1195 = vmatpush.msra.mxu0 %v472
        %1196 = vmatpush.msra.mxu0 %v470
        %1197 = vmatpush.msra.mxu0 %v468
        %1198 = vmatpush.msra.mxu0 %v466
        %1199 = vmatpush.msra.mxu0 %v464
        %1200 = vmatpush.msra.mxu0 %v462
        %1201 = vmatpush.msra.mxu0 %v460
        %1202 = vmatpush.msra.mxu0 %v458
        %1203 = vmatpush.msra.mxu0 %v456
        %1204 = vmatmul.f32.gmra.mxu0 %v1146
        %v1205 = vpop.f32.mrf.mxu0
        %v1206 = vadd.f32 1e-05, %v1205
        %1207 = vdwg.mxu0
        %1208 = vmatpush.msra.mxu0 %v518
        %1209 = vmatpush.msra.mxu0 %v516
        %1210 = vmatpush.msra.mxu0 %v514
        %1211 = vmatpush.msra.mxu0 %v512
        %1212 = vmatpush.msra.mxu0 %v510
        %1213 = vmatpush.msra.mxu0 %v508
        %1214 = vmatpush.msra.mxu0 %v506
        %1215 = vmatpush.msra.mxu0 %v504
        %1216 = vmatpush.msra.mxu0 %v502
        %1217 = vmatpush.msra.mxu0 %v500
        %1218 = vmatpush.msra.mxu0 %v498
        %1219 = vmatpush.msra.mxu0 %v496
        %1220 = vmatpush.msra.mxu0 %v494
        %1221 = vmatpush.msra.mxu0 %v492
        %1222 = vmatpush.msra.mxu0 %v490
        %1223 = vmatpush.msra.mxu0 %v488
        %1224 = vmatmul.f32.gmra.mxu0 %v1147
        %v1225 = vpop.f32.mrf.mxu0
        %v1226 = vadd.f32 %v1206, %v1225
        %1227 = vdwg.mxu0
        %v1228 = vrsqrt.pop %v1186
        %v1229 = vmul.f32 %v1228, %v1186
        %v1230 = vmul.f32 %v1229, %v1228
        %v1231 = vmul.f32 0.5, %v1230
        %v1232 = vsub.f32 1.5, %v1231
        %v1233 = vmul.f32 %v1228, %v1232
        %vm1234 = vweird.f32 %v1186
        %vm1235 = vweird.f32 %v1228
        %vm1236 = vmor %vm1234, %vm1235
        %v1237 = vsel %vm1236, %v1228, %v1233
        %v1238 = vrsqrt.pop %v1226
        %v1239 = vmul.f32 %v1238, %v1226
        %v1240 = vmul.f32 %v1239, %v1238
        %v1241 = vmul.f32 0.5, %v1240
        %v1242 = vsub.f32 1.5, %v1241
        %v1243 = vmul.f32 %v1238, %v1242
        %vm1244 = vweird.f32 %v1226
        %vm1245 = vweird.f32 %v1238
        %vm1246 = vmor %vm1244, %vm1245
        %v1247 = vsel %vm1246, %v1238, %v1243
        %v1248 = vmul.f32 %v1144, %v1237
        %v1249 = vmul.f32 %v1145, %v1247
        %v1251 = vperm.slane %v1062, 0
        %v1252 = vperm.slane %v1062, 1
        %v1255 = vmul.f32 %v1248, %v1251
        %v1256 = vmul.f32 %v1249, %v1252
        %v1258 = vperm.slane %v1063, 0
        %v1259 = vperm.slane %v1063, 1
        %v1262 = vadd.f32 %v1255, %v1258
        %v1263 = vadd.f32 %v1256, %v1259
        %v1264 = vld [vmem:[%s394] sm:$0xff]
        %v1265 = vld [vmem:[%s394 + $0x8] sm:$0xff]
        %v1266 = vadd.f32 %v1262, %v1264
        %v1267 = vadd.f32 %v1263, %v1265
        %v1268 = vmax.f32 %v1266, 0.0
        %v1269 = vmax.f32 %v1267, 0.0
        %1270 = vst [vmem:[%s454] sm:$0xff] %v1268
        %1271 = vst [vmem:[%s454 + $0x8] sm:$0xff] %v1269
        %s1272 = sand.u32 %s238, 1
        %s1273 = scalar_lea.sflag [#allocation4], %s1272
        %s1274 = sand.u32 %s238, 1
        %s1275 = smul.addr %s1274, 16
        %s1276 = scalar_lea.vmem [#allocation13], %s1275
        // Predicated region
        $region81: #{tpu_custom_call.1} parent=55 // pred_check
          %p1277 = pneg %p248
        $region82: #{tpu_custom_call.1} parent=55 // pred_check_branch
          %1279 = sbr.rel (%p1277) target = $region84
        $region83: #{tpu_custom_call.1} parent=55 // pred_region
          %1281 = vsyncadd %s1273, 0
          %s1282 = smul.addr %s31, 2
          %s1283 = smul.addr %s1282, 8
          %s1284 = scalar_lea.hbm %s9, %s1283
          %s1286 = sshll.u32 %s1276, 4
          %s1287 = int_to_ptr.vmem [resolvable:$true] %s1286
          %s1288 = sshll.u32 %s1284, 4
          %s1289 = int_to_ptr.hbm [resolvable:$true] %s1288
          %1291 = dma.vmem_to_hbm [thread:$0]  %s1287, 256, %s1289, %s1273
        $region84: #{tpu_custom_call.1} parent=55 // pred_fallthru
          _
      $region56: #{tpu_custom_call.1} parent=5 // pred_fallthru
        _
      %p1292 = scmp.le.s32.totalorder 2, %s26
      // Predicated region
      $region85: #{tpu_custom_call.1} parent=5 // pred_check
        %p1293 = pneg %p1292
      $region86: #{tpu_custom_call.1} parent=5 // pred_check_branch
        %1295 = sbr.rel (%p1293) target = $region88
      $region87: #{tpu_custom_call.1} parent=5 // pred_region
        %s1296 = ssub.s32 %s26, 2
        // Predicated region
        $region89: #{tpu_custom_call.1} parent=87 // pred_check
          %p1297 = pneg %p254
        $region90: #{tpu_custom_call.1} parent=87 // pred_check_branch
          %1299 = sbr.rel (%p1297) target = $region92
        $region91: #{tpu_custom_call.1} parent=87 // pred_region
          %s1300 = sand.u32 %s239, 1
          %s1301 = scalar_lea.sflag [#allocation4], %s1300
          %s1302 = sand.u32 %s239, 1
          %s1303 = smul.addr %s1302, 16
          %s1304 = scalar_lea.vmem [#allocation13], %s1303
          %1306 = dma.done %s1301, 256
        $region92: #{tpu_custom_call.1} parent=87 // pred_fallthru
          _
      $region88: #{tpu_custom_call.1} parent=5 // pred_fallthru
        _
    $region6: #{tpu_custom_call.1} parent=1 // loop_footer
      %s30 = sadd.s32 1, %s26
    $region7: #{tpu_custom_call.1} parent=1 // loop_footer_branch
      %25 = sbr.rel target = $region3
    $region8: #{tpu_custom_call.1} parent=1 // loop_exit
      _
    %1307 = vsyncpa [#allocation3], 1
    %s1308 = scalar_lea.sflag [#allocation3], 1
    %1309 = vsyncpa %s1308, 1
    %1310 = vsyncpa [#allocation6], 1
    %s1311 = scalar_lea.sflag [#allocation6], 1
    %1312 = vsyncpa %s1311, 1
    %1313 = vsyncpa [#allocation9], 1
    %1314 = vsyncpa [#allocation12], 1
    %1315 = vsyncpa [#allocation4], 1
    %s1316 = scalar_lea.sflag [#allocation4], 1
    %1317 = vsyncpa %s1316, 1

</llo_original>
